<compile_context>
chip_gen: v7x
topology: tpu7x:2x2x1
jax: 0.10.0
libtpu: 0.0.40
codegen_flags: <defaults>
</compile_context>

<pallas_src>
import functools
import math

import jax
import jax.numpy as jnp
from jax.experimental import pallas as pl
from jax.experimental.pallas import tpu as pltpu

_LN_EPS = 1e-5
_VMEM_LIMIT = 48 * 1024 * 1024  # explicit scoped-VMEM budget; safe on v5e/v6e/v7x
# TODO(synk): on v6e/v7x, cast matmul operands to bf16 (keep f32 accumulation and
# f32 LN/softmax statistics) for ~2x MXU throughput and half the HBM traffic.


# ----------------------------- helpers -----------------------------

def _gelu(x):
    # tanh-approximation GELU (matches the Raschka / GPT-2 formulation)
    c = math.sqrt(2.0 / math.pi)
    return 0.5 * x * (1.0 + jnp.tanh(c * (x + 0.044715 * x * x * x)))


def _pick_tile(dim, target, grain):
    """Largest multiple of `grain` that divides `dim` and is <= target; else full dim.

    Keeps blocks aligned to the (8, 128) vreg tiling while staying exact
    (no padding/masking needed) for both toy and realistic sizes.
    """
    if dim <= target:
        return dim
    t = (target // grain) * grain
    while t >= grain:
        if dim % t == 0:
            return t
        t -= grain
    return dim


# ----------------------------- fused LN -> matmul (-> bias -> GELU) -----------------------------

def _ln_matmul_body(x_ref, g_ref, b_ref, w_ref, bias_ref, o_ref, act):
    x = x_ref[...]                                            # (tm, K) f32
    mean = jnp.mean(x, axis=-1, keepdims=True)
    var = jnp.mean((x - mean) ** 2, axis=-1, keepdims=True)   # population variance
    xn = (x - mean) * jax.lax.rsqrt(var + _LN_EPS)
    xn = xn * g_ref[...] + b_ref[...]
    o = jnp.dot(xn, w_ref[...], preferred_element_type=jnp.float32)
    if bias_ref is not None:
        o = o + bias_ref[...]
    if act == "gelu":
        o = _gelu(o)
    o_ref[...] = o


def ln_matmul(x, gamma, beta, w, bias=None, act=None, *, tm_target=256, tn_target=512):
    """act(LayerNorm(x) @ w [+ bias]).  x: (M, K), w: (K, N).

    K (the LayerNorm feature axis) is kept whole per block; M and N are tiled and
    both grid axes are megacore-parallel.
    """
    M, K = x.shape
    N = w.shape[1]
    tm = _pick_tile(M, tm_target, 8)
    tn = _pick_tile(N, tn_target, 128)

    has_bias = bias is not None
    if has_bias:
        def kernel(x_ref, g_ref, b_ref, w_ref, bias_ref, o_ref):
            _ln_matmul_body(x_ref, g_ref, b_ref, w_ref, bias_ref, o_ref, act)
    else:
        def kernel(x_ref, g_ref, b_ref, w_ref, o_ref):
            _ln_matmul_body(x_ref, g_ref, b_ref, w_ref, None, o_ref, act)

    in_specs = [
        pl.BlockSpec((tm, K), lambda i, j: (i, 0)),
        pl.BlockSpec((1, K), lambda i, j: (0, 0)),
        pl.BlockSpec((1, K), lambda i, j: (0, 0)),
        pl.BlockSpec((K, tn), lambda i, j: (0, j)),
    ]
    args = [x, gamma.reshape(1, K), beta.reshape(1, K), w]
    if has_bias:
        in_specs.append(pl.BlockSpec((1, tn), lambda i, j: (0, j)))
        args.append(bias.reshape(1, N))

    return pl.pallas_call(
        kernel,
        out_shape=jax.ShapeDtypeStruct((M, N), jnp.float32),
        grid=(M // tm, N // tn),
        in_specs=in_specs,
        out_specs=pl.BlockSpec((tm, tn), lambda i, j: (i, j)),
        compiler_params=pltpu.CompilerParams(
            dimension_semantics=("parallel", "parallel"),
            vmem_limit_bytes=_VMEM_LIMIT),
    )(*args)


# ----------------------------- tiled matmul (-> bias -> residual) -----------------------------

def _matmul_add_body(x_ref, w_ref, bias_ref, res_ref, o_ref, acc_ref):
    k = pl.program_id(2)

    @pl.when(k == 0)
    def _():
        acc_ref[...] = jnp.zeros_like(acc_ref)

    acc_ref[...] += jnp.dot(x_ref[...], w_ref[...], preferred_element_type=jnp.float32)

    @pl.when(k == pl.num_programs(2) - 1)
    def _():
        o = acc_ref[...]
        if bias_ref is not None:
            o = o + bias_ref[...]
        if res_ref is not None:
            o = o + res_ref[...]
        o_ref[...] = o


def matmul_add(x, w, bias=None, residual=None, *,
               tm_target=256, tn_target=512, tk_target=512):
    """x @ w [+ bias] [+ residual] with a 3-D (M, N, K) grid and f32 VMEM accumulator."""
    M, K = x.shape
    N = w.shape[1]
    tm = _pick_tile(M, tm_target, 8)
    tn = _pick_tile(N, tn_target, 128)
    tk = _pick_tile(K, tk_target, 128)

    has_bias = bias is not None
    has_res = residual is not None

    if has_bias and has_res:
        def kernel(x_ref, w_ref, bias_ref, res_ref, o_ref, acc_ref):
            _matmul_add_body(x_ref, w_ref, bias_ref, res_ref, o_ref, acc_ref)
    elif has_bias:
        def kernel(x_ref, w_ref, bias_ref, o_ref, acc_ref):
            _matmul_add_body(x_ref, w_ref, bias_ref, None, o_ref, acc_ref)
    elif has_res:
        def kernel(x_ref, w_ref, res_ref, o_ref, acc_ref):
            _matmul_add_body(x_ref, w_ref, None, res_ref, o_ref, acc_ref)
    else:
        def kernel(x_ref, w_ref, o_ref, acc_ref):
            _matmul_add_body(x_ref, w_ref, None, None, o_ref, acc_ref)

    in_specs = [
        pl.BlockSpec((tm, tk), lambda i, j, k: (i, k)),
        pl.BlockSpec((tk, tn), lambda i, j, k: (k, j)),
    ]
    args = [x, w]
    if has_bias:
        in_specs.append(pl.BlockSpec((1, tn), lambda i, j, k: (0, j)))
        args.append(bias.reshape(1, N))
    if has_res:
        in_specs.append(pl.BlockSpec((tm, tn), lambda i, j, k: (i, j)))
        args.append(residual)

    return pl.pallas_call(
        kernel,
        out_shape=jax.ShapeDtypeStruct((M, N), jnp.float32),
        grid=(M // tm, N // tn, K // tk),
        in_specs=in_specs,
        out_specs=pl.BlockSpec((tm, tn), lambda i, j, k: (i, j)),
        scratch_shapes=[pltpu.VMEM((tm, tn), jnp.float32)],
        compiler_params=pltpu.CompilerParams(
            dimension_semantics=("parallel", "parallel", "arbitrary"),
            vmem_limit_bytes=_VMEM_LIMIT),
    )(*args)


# ----------------------------- causal multi-head attention -----------------------------

def _attn_kernel(q_ref, k_ref, v_ref, o_ref, *, scale):
    q = q_ref[...]                        # (hb, T, Dh) f32
    k = k_ref[...]
    v = v_ref[...]
    T = q.shape[1]
    # contract last dims (batched over heads) -- no explicit k.T / XLU transpose
    s = jnp.einsum("hqd,hkd->hqk", q, k, preferred_element_type=jnp.float32) * scale
    row = jax.lax.broadcasted_iota(jnp.int32, (T, T), 0)
    col = jax.lax.broadcasted_iota(jnp.int32, (T, T), 1)
    s = jnp.where((row >= col)[None, :, :], s, -jnp.inf)   # causal mask (diag kept)
    m = jnp.max(s, axis=-1, keepdims=True)
    p = jnp.exp(s - m)
    p = p / jnp.sum(p, axis=-1, keepdims=True)
    o_ref[...] = jnp.einsum("hqk,hkd->hqd", p, v, preferred_element_type=jnp.float32)


def causal_attention(q, k, v):
    """q, k, v: (B*H, T, Dh) -> (B*H, T, Dh); several heads per grid step."""
    BH, T, Dh = q.shape
    scale = 1.0 / math.sqrt(Dh)

    # pick a head-block: at least 2 grid steps when possible (megacore), modest VMEM
    hb = BH
    if BH >= 2:
        hb = BH // 2
        while BH % hb:
            hb -= 1
    budget = 8 * 1024 * 1024
    while hb > 1 and (4 * hb * T * Dh + hb * T * T) * 4 > budget:
        hb -= 1
        while BH % hb:
            hb -= 1
    # TODO(synk): for long contexts use a flash-style Q-tile x KV-tile grid with
    # online softmax instead of materializing the (T, T) scores per head block.

    spec = pl.BlockSpec((hb, T, Dh), lambda i: (i, 0, 0))
    return pl.pallas_call(
        functools.partial(_attn_kernel, scale=scale),
        out_shape=jax.ShapeDtypeStruct((BH, T, Dh), jnp.float32),
        grid=(BH // hb,),
        in_specs=[spec, spec, spec],
        out_specs=spec,
        compiler_params=pltpu.CompilerParams(
            dimension_semantics=("parallel",),
            vmem_limit_bytes=_VMEM_LIMIT),
    )(q, k, v)


# ----------------------------- parameter init -----------------------------

def init_params(key, cfg):
    D = cfg["emb_dim"]
    V = cfg["vocab_size"]
    C = cfg["context_length"]
    FF = 4 * D

    def nrm(k, shape):
        return jax.random.normal(k, shape, jnp.float32) * 0.02

    keys = jax.random.split(key, 3 + cfg["n_layers"])
    params = {
        "tok_emb": nrm(keys[0], (V, D)),
        "pos_emb": nrm(keys[1], (C, D)),
        "lnf_g": jnp.ones((D,), jnp.float32),
        "lnf_b": jnp.zeros((D,), jnp.float32),
        "w_head": nrm(keys[2], (D, V)),          # out_head: bias=False
        "blocks": [],
    }
    zeros_d = jnp.zeros((D,), jnp.float32)
    for li in range(cfg["n_layers"]):
        lk = jax.random.split(keys[3 + li], 4)
        params["blocks"].append({
            "ln1_g": jnp.ones((D,), jnp.float32), "ln1_b": zeros_d,
            "wqkv": nrm(lk[0], (D, 3 * D)),      # fused Q/K/V weight; qkv_bias=False -> no bias
            "wo": nrm(lk[1], (D, D)), "bo": zeros_d,
            "ln2_g": jnp.ones((D,), jnp.float32), "ln2_b": zeros_d,
            "w1": nrm(lk[2], (D, FF)), "b1": jnp.zeros((FF,), jnp.float32),
            "w2": nrm(lk[3], (FF, D)), "b2": zeros_d,
        })
    return params


# ----------------------------- forward pass -----------------------------

def gpt_forward(params, input_ids, cfg):
    B, T = input_ids.shape
    D = cfg["emb_dim"]
    H = cfg["n_heads"]
    Dh = D // H

    # embedding gathers + positional broadcast-add stay in JAX glue (no tile, no extra kernel)
    tok = jnp.take(params["tok_emb"], input_ids, axis=0)        # (B, T, D)
    pos = params["pos_emb"][:T]                                  # (T, D)
    x2d = (tok + pos[None, :, :]).reshape(B * T, D)
    # drop_emb / attention / residual dropout: drop_rate = 0.0 (inference) -> identity

    def split_heads(t):   # (B*T, D) -> (B*H, T, Dh)
        return t.reshape(B, T, H, Dh).transpose(0, 2, 1, 3).reshape(B * H, T, Dh)

    def merge_heads(t):   # (B*H, T, Dh) -> (B*T, D)
        return t.reshape(B, H, T, Dh).transpose(0, 2, 1, 3).reshape(B * T, D)

    for blk in params["blocks"]:
        # --- attention sublayer: fused LN -> QKV matmul, attention, fused out-proj+bias+residual
        qkv = ln_matmul(x2d, blk["ln1_g"], blk["ln1_b"], blk["wqkv"])       # (B*T, 3D)
        q, k, v = qkv[:, :D], qkv[:, D:2 * D], qkv[:, 2 * D:]
        ctx = causal_attention(split_heads(q), split_heads(k), split_heads(v))
        x2d = matmul_add(merge_heads(ctx), blk["wo"], bias=blk["bo"], residual=x2d)

        # --- feed-forward sublayer: fused LN -> W1+bias+GELU, then W2+bias+residual
        h = ln_matmul(x2d, blk["ln2_g"], blk["ln2_b"], blk["w1"],
                      bias=blk["b1"], act="gelu")                           # (B*T, 4D)
        x2d = matmul_add(h, blk["w2"], bias=blk["b2"], residual=x2d)

    # final LayerNorm fused into the LM head matmul (out_head has no bias)
    logits = ln_matmul(x2d, params["lnf_g"], params["lnf_b"], params["w_head"])
    return logits.reshape(B, T, cfg["vocab_size"])


# ----------------------------- main -----------------------------

if __name__ == "__main__":
    cfg = {
        "vocab_size": 64,
        "context_length": 16,
        "emb_dim": 32,
        "n_heads": 4,
        "n_layers": 2,
        "drop_rate": 0.0,   # dropout is identity at rate 0 / inference
        "qkv_bias": False,
    }
    key = jax.random.PRNGKey(0)
    pkey, ikey = jax.random.split(key)
    params = init_params(pkey, cfg)

    B, T = 2, 8
    input_ids = jax.random.randint(ikey, (B, T), 0, cfg["vocab_size"], dtype=jnp.int32)

    fwd = jax.jit(functools.partial(gpt_forward, cfg=cfg))
    logits = fwd(params, input_ids)
    logits = jax.block_until_ready(logits)

    assert logits.shape == (B, T, cfg["vocab_size"])
    assert bool(jnp.all(jnp.isfinite(logits)))
    print("KERNEL_OK")
</pallas_src>

<mosaic_0001>
module attributes {stable_mosaic.version = 11 : i64} {
  func.func @kernel(%arg0: i32, %arg1: i32, %arg2: memref<16x32xf32, #tpu.memory_space<vmem>>, %arg3: memref<1x32xf32, #tpu.memory_space<vmem>>, %arg4: memref<1x32xf32, #tpu.memory_space<vmem>>, %arg5: memref<32x96xf32, #tpu.memory_space<vmem>>, %arg6: memref<16x96xf32, #tpu.memory_space<vmem>>) attributes {dimension_semantics = [#tpu.dimension_semantics<parallel>, #tpu.dimension_semantics<parallel>], iteration_bounds = array<i64: 1, 1>, scalar_prefetch = 0 : i64, scratch_operands = 0 : i64, tpu.core_type = #tpu.core_type<tc>, window_params = [{transform_indices = @transform_0, window_bounds = array<i64: 16, 32>}, {pipeline_mode = #tpu.pipeline_mode<synchronous>, transform_indices = @transform_1, window_bounds = array<i64: 1, 32>}, {pipeline_mode = #tpu.pipeline_mode<synchronous>, transform_indices = @transform_2, window_bounds = array<i64: 1, 32>}, {transform_indices = @transform_3, window_bounds = array<i64: 32, 96>}, {transform_indices = @transform_4, window_bounds = array<i64: 16, 96>}]} {
    %c0 = arith.constant 0 : index
    %c0_0 = arith.constant 0 : index
    %0 = vector.load %arg2[%c0, %c0_0] : memref<16x32xf32, #tpu.memory_space<vmem>>, vector<16x32xf32>
    %cst = arith.constant dense<0.000000e+00> : vector<16xf32>
    %1 = vector.multi_reduction <add>, %0, %cst [1] : vector<16x32xf32> to vector<16xf32>
    %2 = vector.shape_cast %1 : vector<16xf32> to vector<16x1xf32>
    %cst_1 = arith.constant 3.200000e+01 : f32
    %3 = vector.broadcast %cst_1 : f32 to vector<16x1xf32>
    %4 = arith.divf %2, %3 : vector<16x1xf32>
    %5 = vector.broadcast %4 : vector<16x1xf32> to vector<16x32xf32>
    %6 = arith.subf %0, %5 : vector<16x32xf32>
    %7 = arith.mulf %6, %6 : vector<16x32xf32>
    %cst_2 = arith.constant dense<0.000000e+00> : vector<16xf32>
    %8 = vector.multi_reduction <add>, %7, %cst_2 [1] : vector<16x32xf32> to vector<16xf32>
    %9 = vector.shape_cast %8 : vector<16xf32> to vector<16x1xf32>
    %cst_3 = arith.constant 3.200000e+01 : f32
    %10 = vector.broadcast %cst_3 : f32 to vector<16x1xf32>
    %11 = arith.divf %9, %10 : vector<16x1xf32>
    %12 = vector.broadcast %4 : vector<16x1xf32> to vector<16x32xf32>
    %13 = arith.subf %0, %12 : vector<16x32xf32>
    %cst_4 = arith.constant 9.99999974E-6 : f32
    %14 = vector.broadcast %cst_4 : f32 to vector<16x1xf32>
    %15 = arith.addf %11, %14 : vector<16x1xf32>
    %16 = math.rsqrt %15 : vector<16x1xf32>
    %17 = vector.broadcast %16 : vector<16x1xf32> to vector<16x32xf32>
    %18 = arith.mulf %13, %17 : vector<16x32xf32>
    %c0_5 = arith.constant 0 : index
    %c0_6 = arith.constant 0 : index
    %19 = vector.load %arg3[%c0_5, %c0_6] : memref<1x32xf32, #tpu.memory_space<vmem>>, vector<1x32xf32>
    %20 = vector.broadcast %19 : vector<1x32xf32> to vector<16x32xf32>
    %21 = arith.mulf %18, %20 : vector<16x32xf32>
    %c0_7 = arith.constant 0 : index
    %c0_8 = arith.constant 0 : index
    %22 = vector.load %arg4[%c0_7, %c0_8] : memref<1x32xf32, #tpu.memory_space<vmem>>, vector<1x32xf32>
    %23 = vector.broadcast %22 : vector<1x32xf32> to vector<16x32xf32>
    %24 = arith.addf %21, %23 : vector<16x32xf32>
    %c0_9 = arith.constant 0 : index
    %c0_10 = arith.constant 0 : index
    %25 = vector.load %arg5[%c0_9, %c0_10] : memref<32x96xf32, #tpu.memory_space<vmem>>, vector<32x96xf32>
    %cst_11 = arith.constant dense<0.000000e+00> : vector<16x96xf32>
    %26 = tpu.matmul %24, %25, %cst_11 {dimension_numbers = #tpu.dot_dimension_numbers<[1], [0], [0], [1], [0, 0, 1, 1], [], []>} : vector<16x32xf32>, vector<32x96xf32>, vector<16x96xf32> -> vector<16x96xf32>
    %c0_12 = arith.constant 0 : index
    %c0_13 = arith.constant 0 : index
    %27 = vector.load %arg6[%c0_12, %c0_13] : memref<16x96xf32, #tpu.memory_space<vmem>>, vector<16x96xf32>
    tpu.vector_store %arg6[%c0_12, %c0_13], %26 {strides = array<i32>} : memref<16x96xf32, #tpu.memory_space<vmem>>, vector<16x96xf32>,
    return
  }
  func.func @transform_0(%arg0: i32, %arg1: i32) -> (i32, i32) {
    %c0_i32 = arith.constant 0 : i32
    %c0_i32_0 = arith.constant 0 : i32
    return %arg0, %c0_i32 : i32, i32
  }
  func.func @transform_1(%arg0: i32, %arg1: i32) -> (i32, i32) {
    %c0_i32 = arith.constant 0 : i32
    %c0_i32_0 = arith.constant 0 : i32
    %c0_i32_1 = arith.constant 0 : i32
    return %c0_i32, %c0_i32_0 : i32, i32
  }
  func.func @transform_2(%arg0: i32, %arg1: i32) -> (i32, i32) {
    %c0_i32 = arith.constant 0 : i32
    %c0_i32_0 = arith.constant 0 : i32
    %c0_i32_1 = arith.constant 0 : i32
    return %c0_i32, %c0_i32_0 : i32, i32
  }
  func.func @transform_3(%arg0: i32, %arg1: i32) -> (i32, i32) {
    %c0_i32 = arith.constant 0 : i32
    %c0_i32_0 = arith.constant 0 : i32
    return %c0_i32, %arg1 : i32, i32
  }
  func.func @transform_4(%arg0: i32, %arg1: i32) -> (i32, i32) {
    %c0_i32 = arith.constant 0 : i32
    return %arg0, %arg1 : i32, i32
  }
}

module attributes {stable_mosaic.version = 11 : i64} {
  func.func @_attn_kernel(%arg0: i32, %arg1: memref<4x8x8xf32, #tpu.memory_space<vmem>>, %arg2: memref<4x8x8xf32, #tpu.memory_space<vmem>>, %arg3: memref<4x8x8xf32, #tpu.memory_space<vmem>>, %arg4: memref<4x8x8xf32, #tpu.memory_space<vmem>>) attributes {dimension_semantics = [#tpu.dimension_semantics<parallel>], iteration_bounds = array<i64: 2>, scalar_prefetch = 0 : i64, scratch_operands = 0 : i64, tpu.core_type = #tpu.core_type<tc>, window_params = [{transform_indices = @transform_0, window_bounds = array<i64: 4, 8, 8>}, {transform_indices = @transform_1, window_bounds = array<i64: 4, 8, 8>}, {transform_indices = @transform_2, window_bounds = array<i64: 4, 8, 8>}, {transform_indices = @transform_3, window_bounds = array<i64: 4, 8, 8>}]} {
    %c0 = arith.constant 0 : index
    %c0_0 = arith.constant 0 : index
    %c0_1 = arith.constant 0 : index
    %0 = vector.load %arg1[%c0, %c0_0, %c0_1] : memref<4x8x8xf32, #tpu.memory_space<vmem>>, vector<4x8x8xf32>
    %c0_2 = arith.constant 0 : index
    %c0_3 = arith.constant 0 : index
    %c0_4 = arith.constant 0 : index
    %1 = vector.load %arg2[%c0_2, %c0_3, %c0_4] : memref<4x8x8xf32, #tpu.memory_space<vmem>>, vector<4x8x8xf32>
    %c0_5 = arith.constant 0 : index
    %c0_6 = arith.constant 0 : index
    %c0_7 = arith.constant 0 : index
    %2 = vector.load %arg3[%c0_5, %c0_6, %c0_7] : memref<4x8x8xf32, #tpu.memory_space<vmem>>, vector<4x8x8xf32>
    "tpu.trace_start"() <{level = 10 : i32, message = "hqd,hkd->hqk"}> : () -> ()
    %cst = arith.constant dense<0.000000e+00> : vector<4x8x8xf32>
    %3 = tpu.matmul %0, %1, %cst {dimension_numbers = #tpu.dot_dimension_numbers<[2], [2], [1], [1], [0, 0, 0, 1, 1, 1], [0], [0]>} : vector<4x8x8xf32>, vector<4x8x8xf32>, vector<4x8x8xf32> -> vector<4x8x8xf32>
    "tpu.trace_stop"() : () -> ()
    %cst_8 = arith.constant 0.353553385 : f32
    %4 = vector.broadcast %cst_8 : f32 to vector<4x8x8xf32>
    %5 = arith.mulf %3, %4 : vector<4x8x8xf32>
    %6 = tpu.iota {dimensions = array<i32: 0>} : vector<8x8xi32>
    %7 = tpu.iota {dimensions = array<i32: 1>} : vector<8x8xi32>
    %8 = arith.cmpi sge, %6, %7 : vector<8x8xi32>
    %9 = vector.shape_cast %8 : vector<8x8xi1> to vector<1x8x8xi1>
    %cst_9 = arith.constant 0xFF800000 : f32
    %10 = vector.shape_cast %9 : vector<1x8x8xi1> to vector<1x8x8xi1>
    %11 = vector.broadcast %10 : vector<1x8x8xi1> to vector<4x8x8xi1>
    %12 = vector.broadcast %cst_9 : f32 to vector<4x8x8xf32>
    %13 = arith.select %11, %5, %12 : vector<4x8x8xi1>, vector<4x8x8xf32>
    %cst_10 = arith.constant dense<0xFF800000> : vector<4x8xf32>
    %14 = vector.multi_reduction <maximumf>, %13, %cst_10 [2] : vector<4x8x8xf32> to vector<4x8xf32>
    %15 = vector.shape_cast %14 : vector<4x8xf32> to vector<4x8x1xf32>
    %16 = vector.broadcast %15 : vector<4x8x1xf32> to vector<4x8x8xf32>
    %17 = arith.subf %13, %16 : vector<4x8x8xf32>
    %18 = math.exp %17 : vector<4x8x8xf32>
    %cst_11 = arith.constant dense<0.000000e+00> : vector<4x8xf32>
    %19 = vector.multi_reduction <add>, %18, %cst_11 [2] : vector<4x8x8xf32> to vector<4x8xf32>
    %20 = vector.shape_cast %19 : vector<4x8xf32> to vector<4x8x1xf32>
    %21 = vector.broadcast %20 : vector<4x8x1xf32> to vector<4x8x8xf32>
    %22 = arith.divf %18, %21 : vector<4x8x8xf32>
    "tpu.trace_start"() <{level = 10 : i32, message = "hqk,hkd->hqd"}> : () -> ()
    %cst_12 = arith.constant dense<0.000000e+00> : vector<4x8x8xf32>
    %23 = tpu.matmul %22, %2, %cst_12 {dimension_numbers = #tpu.dot_dimension_numbers<[2], [1], [1], [2], [0, 0, 0, 1, 1, 2], [0], [0]>} : vector<4x8x8xf32>, vector<4x8x8xf32>, vector<4x8x8xf32> -> vector<4x8x8xf32>
    "tpu.trace_stop"() : () -> ()
    %c0_13 = arith.constant 0 : index
    %c0_14 = arith.constant 0 : index
    %c0_15 = arith.constant 0 : index
    %24 = vector.load %arg4[%c0_13, %c0_14, %c0_15] : memref<4x8x8xf32, #tpu.memory_space<vmem>>, vector<4x8x8xf32>
    tpu.vector_store %arg4[%c0_13, %c0_14, %c0_15], %23 {strides = array<i32>} : memref<4x8x8xf32, #tpu.memory_space<vmem>>, vector<4x8x8xf32>,
    return
  }
  func.func @transform_0(%arg0: i32) -> (i32, i32, i32) {
    %c0_i32 = arith.constant 0 : i32
    %c0_i32_0 = arith.constant 0 : i32
    %c0_i32_1 = arith.constant 0 : i32
    return %arg0, %c0_i32, %c0_i32_0 : i32, i32, i32
  }
  func.func @transform_1(%arg0: i32) -> (i32, i32, i32) {
    %c0_i32 = arith.constant 0 : i32
    %c0_i32_0 = arith.constant 0 : i32
    %c0_i32_1 = arith.constant 0 : i32
    return %arg0, %c0_i32, %c0_i32_0 : i32, i32, i32
  }
  func.func @transform_2(%arg0: i32) -> (i32, i32, i32) {
    %c0_i32 = arith.constant 0 : i32
    %c0_i32_0 = arith.constant 0 : i32
    %c0_i32_1 = arith.constant 0 : i32
    return %arg0, %c0_i32, %c0_i32_0 : i32, i32, i32
  }
  func.func @transform_3(%arg0: i32) -> (i32, i32, i32) {
    %c0_i32 = arith.constant 0 : i32
    %c0_i32_0 = arith.constant 0 : i32
    %c0_i32_1 = arith.constant 0 : i32
    return %arg0, %c0_i32, %c0_i32_0 : i32, i32, i32
  }
}

module attributes {stable_mosaic.version = 11 : i64} {
  func.func @kernel(%arg0: i32, %arg1: i32, %arg2: i32, %arg3: memref<16x32xf32, #tpu.memory_space<vmem>>, %arg4: memref<32x32xf32, #tpu.memory_space<vmem>>, %arg5: memref<1x32xf32, #tpu.memory_space<vmem>>, %arg6: memref<16x32xf32, #tpu.memory_space<vmem>>, %arg7: memref<16x32xf32, #tpu.memory_space<vmem>>, %arg8: memref<16x32xf32, #tpu.memory_space<vmem>>) attributes {dimension_semantics = [#tpu.dimension_semantics<parallel>, #tpu.dimension_semantics<parallel>, #tpu.dimension_semantics<arbitrary>], iteration_bounds = array<i64: 1, 1, 1>, scalar_prefetch = 0 : i64, scratch_operands = 1 : i64, tpu.core_type = #tpu.core_type<tc>, window_params = [{transform_indices = @transform_0, window_bounds = array<i64: 16, 32>}, {transform_indices = @transform_1, window_bounds = array<i64: 32, 32>}, {transform_indices = @transform_2, window_bounds = array<i64: 1, 32>}, {transform_indices = @transform_3, window_bounds = array<i64: 16, 32>}, {transform_indices = @transform_4, window_bounds = array<i64: 16, 32>}]} {
    %c0_i32 = arith.constant 0 : i32
    %0 = arith.cmpi eq, %arg2, %c0_i32 : i32
    %1 = arith.extui %0 : i1 to i32
    %c0_i32_0 = arith.constant 0 : i32
    %2 = arith.cmpi ne, %1, %c0_i32_0 : i32
    scf.if %2 {
      %cst_10 = arith.constant 0.000000e+00 : f32
      %12 = vector.broadcast %cst_10 : f32 to vector<16x32xf32>
      %c0_11 = arith.constant 0 : index
      %c0_12 = arith.constant 0 : index
      %13 = vector.load %arg8[%c0_11, %c0_12] : memref<16x32xf32, #tpu.memory_space<vmem>>, vector<16x32xf32>
      tpu.vector_store %arg8[%c0_11, %c0_12], %12 {strides = array<i32>} : memref<16x32xf32, #tpu.memory_space<vmem>>, vector<16x32xf32>,
    } else {
    }
    %c0 = arith.constant 0 : index
    %c0_1 = arith.constant 0 : index
    %3 = vector.load %arg8[%c0, %c0_1] : memref<16x32xf32, #tpu.memory_space<vmem>>, vector<16x32xf32>
    %c0_2 = arith.constant 0 : index
    %c0_3 = arith.constant 0 : index
    %4 = vector.load %arg3[%c0_2, %c0_3] : memref<16x32xf32, #tpu.memory_space<vmem>>, vector<16x32xf32>
    %c0_4 = arith.constant 0 : index
    %c0_5 = arith.constant 0 : index
    %5 = vector.load %arg4[%c0_4, %c0_5] : memref<32x32xf32, #tpu.memory_space<vmem>>, vector<32x32xf32>
    %cst = arith.constant dense<0.000000e+00> : vector<16x32xf32>
    %6 = tpu.matmul %4, %5, %cst {dimension_numbers = #tpu.dot_dimension_numbers<[1], [0], [0], [1], [0, 0, 1, 1], [], []>} : vector<16x32xf32>, vector<32x32xf32>, vector<16x32xf32> -> vector<16x32xf32>
    %7 = arith.addf %3, %6 : vector<16x32xf32>
    %c0_6 = arith.constant 0 : index
    %c0_7 = arith.constant 0 : index
    %8 = vector.load %arg8[%c0_6, %c0_7] : memref<16x32xf32, #tpu.memory_space<vmem>>, vector<16x32xf32>
    tpu.vector_store %arg8[%c0_6, %c0_7], %7 {strides = array<i32>} : memref<16x32xf32, #tpu.memory_space<vmem>>, vector<16x32xf32>,
    %c0_i32_8 = arith.constant 0 : i32
    %9 = arith.cmpi eq, %arg2, %c0_i32_8 : i32
    %10 = arith.extui %9 : i1 to i32
    %c0_i32_9 = arith.constant 0 : i32
    %11 = arith.cmpi ne, %10, %c0_i32_9 : i32
    scf.if %11 {
      %c0_10 = arith.constant 0 : index
      %c0_11 = arith.constant 0 : index
      %12 = vector.load %arg8[%c0_10, %c0_11] : memref<16x32xf32, #tpu.memory_space<vmem>>, vector<16x32xf32>
      %c0_12 = arith.constant 0 : index
      %c0_13 = arith.constant 0 : index
      %13 = vector.load %arg5[%c0_12, %c0_13] : memref<1x32xf32, #tpu.memory_space<vmem>>, vector<1x32xf32>
      %14 = vector.broadcast %13 : vector<1x32xf32> to vector<16x32xf32>
      %15 = arith.addf %12, %14 : vector<16x32xf32>
      %c0_14 = arith.constant 0 : index
      %c0_15 = arith.constant 0 : index
      %16 = vector.load %arg6[%c0_14, %c0_15] : memref<16x32xf32, #tpu.memory_space<vmem>>, vector<16x32xf32>
      %17 = arith.addf %15, %16 : vector<16x32xf32>
      %c0_16 = arith.constant 0 : index
      %c0_17 = arith.constant 0 : index
      %18 = vector.load %arg7[%c0_16, %c0_17] : memref<16x32xf32, #tpu.memory_space<vmem>>, vector<16x32xf32>
      tpu.vector_store %arg7[%c0_16, %c0_17], %17 {strides = array<i32>} : memref<16x32xf32, #tpu.memory_space<vmem>>, vector<16x32xf32>,
    } else {
    }
    return
  }
  func.func @transform_0(%arg0: i32, %arg1: i32, %arg2: i32) -> (i32, i32) {
    %c0_i32 = arith.constant 0 : i32
    return %arg0, %arg2 : i32, i32
  }
  func.func @transform_1(%arg0: i32, %arg1: i32, %arg2: i32) -> (i32, i32) {
    %c0_i32 = arith.constant 0 : i32
    return %arg2, %arg1 : i32, i32
  }
  func.func @transform_2(%arg0: i32, %arg1: i32, %arg2: i32) -> (i32, i32) {
    %c0_i32 = arith.constant 0 : i32
    %c0_i32_0 = arith.constant 0 : i32
    return %c0_i32, %arg1 : i32, i32
  }
  func.func @transform_3(%arg0: i32, %arg1: i32, %arg2: i32) -> (i32, i32) {
    %c0_i32 = arith.constant 0 : i32
    return %arg0, %arg1 : i32, i32
  }
  func.func @transform_4(%arg0: i32, %arg1: i32, %arg2: i32) -> (i32, i32) {
    %c0_i32 = arith.constant 0 : i32
    return %arg0, %arg1 : i32, i32
  }
}

module attributes {stable_mosaic.version = 11 : i64} {
  func.func @kernel(%arg0: i32, %arg1: i32, %arg2: memref<16x32xf32, #tpu.memory_space<vmem>>, %arg3: memref<1x32xf32, #tpu.memory_space<vmem>>, %arg4: memref<1x32xf32, #tpu.memory_space<vmem>>, %arg5: memref<32x128xf32, #tpu.memory_space<vmem>>, %arg6: memref<1x128xf32, #tpu.memory_space<vmem>>, %arg7: memref<16x128xf32, #tpu.memory_space<vmem>>) attributes {dimension_semantics = [#tpu.dimension_semantics<parallel>, #tpu.dimension_semantics<parallel>], iteration_bounds = array<i64: 1, 1>, scalar_prefetch = 0 : i64, scratch_operands = 0 : i64, tpu.core_type = #tpu.core_type<tc>, window_params = [{transform_indices = @transform_0, window_bounds = array<i64: 16, 32>}, {pipeline_mode = #tpu.pipeline_mode<synchronous>, transform_indices = @transform_1, window_bounds = array<i64: 1, 32>}, {pipeline_mode = #tpu.pipeline_mode<synchronous>, transform_indices = @transform_2, window_bounds = array<i64: 1, 32>}, {transform_indices = @transform_3, window_bounds = array<i64: 32, 128>}, {transform_indices = @transform_4, window_bounds = array<i64: 1, 128>}, {transform_indices = @transform_5, window_bounds = array<i64: 16, 128>}]} {
    %c0 = arith.constant 0 : index
    %c0_0 = arith.constant 0 : index
    %0 = vector.load %arg2[%c0, %c0_0] : memref<16x32xf32, #tpu.memory_space<vmem>>, vector<16x32xf32>
    %cst = arith.constant dense<0.000000e+00> : vector<16xf32>
    %1 = vector.multi_reduction <add>, %0, %cst [1] : vector<16x32xf32> to vector<16xf32>
    %2 = vector.shape_cast %1 : vector<16xf32> to vector<16x1xf32>
    %cst_1 = arith.constant 3.200000e+01 : f32
    %3 = vector.broadcast %cst_1 : f32 to vector<16x1xf32>
    %4 = arith.divf %2, %3 : vector<16x1xf32>
    %5 = vector.broadcast %4 : vector<16x1xf32> to vector<16x32xf32>
    %6 = arith.subf %0, %5 : vector<16x32xf32>
    %7 = arith.mulf %6, %6 : vector<16x32xf32>
    %cst_2 = arith.constant dense<0.000000e+00> : vector<16xf32>
    %8 = vector.multi_reduction <add>, %7, %cst_2 [1] : vector<16x32xf32> to vector<16xf32>
    %9 = vector.shape_cast %8 : vector<16xf32> to vector<16x1xf32>
    %cst_3 = arith.constant 3.200000e+01 : f32
    %10 = vector.broadcast %cst_3 : f32 to vector<16x1xf32>
    %11 = arith.divf %9, %10 : vector<16x1xf32>
    %12 = vector.broadcast %4 : vector<16x1xf32> to vector<16x32xf32>
    %13 = arith.subf %0, %12 : vector<16x32xf32>
    %cst_4 = arith.constant 9.99999974E-6 : f32
    %14 = vector.broadcast %cst_4 : f32 to vector<16x1xf32>
    %15 = arith.addf %11, %14 : vector<16x1xf32>
    %16 = math.rsqrt %15 : vector<16x1xf32>
    %17 = vector.broadcast %16 : vector<16x1xf32> to vector<16x32xf32>
    %18 = arith.mulf %13, %17 : vector<16x32xf32>
    %c0_5 = arith.constant 0 : index
    %c0_6 = arith.constant 0 : index
    %19 = vector.load %arg3[%c0_5, %c0_6] : memref<1x32xf32, #tpu.memory_space<vmem>>, vector<1x32xf32>
    %20 = vector.broadcast %19 : vector<1x32xf32> to vector<16x32xf32>
    %21 = arith.mulf %18, %20 : vector<16x32xf32>
    %c0_7 = arith.constant 0 : index
    %c0_8 = arith.constant 0 : index
    %22 = vector.load %arg4[%c0_7, %c0_8] : memref<1x32xf32, #tpu.memory_space<vmem>>, vector<1x32xf32>
    %23 = vector.broadcast %22 : vector<1x32xf32> to vector<16x32xf32>
    %24 = arith.addf %21, %23 : vector<16x32xf32>
    %c0_9 = arith.constant 0 : index
    %c0_10 = arith.constant 0 : index
    %25 = vector.load %arg5[%c0_9, %c0_10] : memref<32x128xf32, #tpu.memory_space<vmem>>, vector<32x128xf32>
    %cst_11 = arith.constant dense<0.000000e+00> : vector<16x128xf32>
    %26 = tpu.matmul %24, %25, %cst_11 {dimension_numbers = #tpu.dot_dimension_numbers<[1], [0], [0], [1], [0, 0, 1, 1], [], []>} : vector<16x32xf32>, vector<32x128xf32>, vector<16x128xf32> -> vector<16x128xf32>
    %c0_12 = arith.constant 0 : index
    %c0_13 = arith.constant 0 : index
    %27 = vector.load %arg6[%c0_12, %c0_13] : memref<1x128xf32, #tpu.memory_space<vmem>>, vector<1x128xf32>
    %28 = vector.broadcast %27 : vector<1x128xf32> to vector<16x128xf32>
    %29 = arith.addf %26, %28 : vector<16x128xf32>
    %cst_14 = arith.constant 5.000000e-01 : f32
    %30 = vector.broadcast %cst_14 : f32 to vector<16x128xf32>
    %31 = arith.mulf %30, %29 : vector<16x128xf32>
    %cst_15 = arith.constant 4.471500e-02 : f32
    %32 = vector.broadcast %cst_15 : f32 to vector<16x128xf32>
    %33 = arith.mulf %32, %29 : vector<16x128xf32>
    %34 = arith.mulf %33, %29 : vector<16x128xf32>
    %35 = arith.mulf %34, %29 : vector<16x128xf32>
    %36 = arith.addf %29, %35 : vector<16x128xf32>
    %cst_16 = arith.constant 0.797884583 : f32
    %37 = vector.broadcast %cst_16 : f32 to vector<16x128xf32>
    %38 = arith.mulf %37, %36 : vector<16x128xf32>
    %39 = math.tanh %38 : vector<16x128xf32>
    %cst_17 = arith.constant 1.000000e+00 : f32
    %40 = vector.broadcast %cst_17 : f32 to vector<16x128xf32>
    %41 = arith.addf %40, %39 : vector<16x128xf32>
    %42 = arith.mulf %31, %41 : vector<16x128xf32>
    %c0_18 = arith.constant 0 : index
    %c0_19 = arith.constant 0 : index
    %43 = vector.load %arg7[%c0_18, %c0_19] : memref<16x128xf32, #tpu.memory_space<vmem>>, vector<16x128xf32>
    tpu.vector_store %arg7[%c0_18, %c0_19], %42 {strides = array<i32>} : memref<16x128xf32, #tpu.memory_space<vmem>>, vector<16x128xf32>,
    return
  }
  func.func @transform_0(%arg0: i32, %arg1: i32) -> (i32, i32) {
    %c0_i32 = arith.constant 0 : i32
    %c0_i32_0 = arith.constant 0 : i32
    return %arg0, %c0_i32 : i32, i32
  }
  func.func @transform_1(%arg0: i32, %arg1: i32) -> (i32, i32) {
    %c0_i32 = arith.constant 0 : i32
    %c0_i32_0 = arith.constant 0 : i32
    %c0_i32_1 = arith.constant 0 : i32
    return %c0_i32, %c0_i32_0 : i32, i32
  }
  func.func @transform_2(%arg0: i32, %arg1: i32) -> (i32, i32) {
    %c0_i32 = arith.constant 0 : i32
    %c0_i32_0 = arith.constant 0 : i32
    %c0_i32_1 = arith.constant 0 : i32
    return %c0_i32, %c0_i32_0 : i32, i32
  }
  func.func @transform_3(%arg0: i32, %arg1: i32) -> (i32, i32) {
    %c0_i32 = arith.constant 0 : i32
    %c0_i32_0 = arith.constant 0 : i32
    return %c0_i32, %arg1 : i32, i32
  }
  func.func @transform_4(%arg0: i32, %arg1: i32) -> (i32, i32) {
    %c0_i32 = arith.constant 0 : i32
    %c0_i32_0 = arith.constant 0 : i32
    return %c0_i32, %arg1 : i32, i32
  }
  func.func @transform_5(%arg0: i32, %arg1: i32) -> (i32, i32) {
    %c0_i32 = arith.constant 0 : i32
    return %arg0, %arg1 : i32, i32
  }
}

module attributes {stable_mosaic.version = 11 : i64} {
  func.func @kernel(%arg0: i32, %arg1: i32, %arg2: i32, %arg3: memref<16x128xf32, #tpu.memory_space<vmem>>, %arg4: memref<128x32xf32, #tpu.memory_space<vmem>>, %arg5: memref<1x32xf32, #tpu.memory_space<vmem>>, %arg6: memref<16x32xf32, #tpu.memory_space<vmem>>, %arg7: memref<16x32xf32, #tpu.memory_space<vmem>>, %arg8: memref<16x32xf32, #tpu.memory_space<vmem>>) attributes {dimension_semantics = [#tpu.dimension_semantics<parallel>, #tpu.dimension_semantics<parallel>, #tpu.dimension_semantics<arbitrary>], iteration_bounds = array<i64: 1, 1, 1>, scalar_prefetch = 0 : i64, scratch_operands = 1 : i64, tpu.core_type = #tpu.core_type<tc>, window_params = [{transform_indices = @transform_0, window_bounds = array<i64: 16, 128>}, {transform_indices = @transform_1, window_bounds = array<i64: 128, 32>}, {transform_indices = @transform_2, window_bounds = array<i64: 1, 32>}, {transform_indices = @transform_3, window_bounds = array<i64: 16, 32>}, {transform_indices = @transform_4, window_bounds = array<i64: 16, 32>}]} {
    %c0_i32 = arith.constant 0 : i32
    %0 = arith.cmpi eq, %arg2, %c0_i32 : i32
    %1 = arith.extui %0 : i1 to i32
    %c0_i32_0 = arith.constant 0 : i32
    %2 = arith.cmpi ne, %1, %c0_i32_0 : i32
    scf.if %2 {
      %cst_10 = arith.constant 0.000000e+00 : f32
      %12 = vector.broadcast %cst_10 : f32 to vector<16x32xf32>
      %c0_11 = arith.constant 0 : index
      %c0_12 = arith.constant 0 : index
      %13 = vector.load %arg8[%c0_11, %c0_12] : memref<16x32xf32, #tpu.memory_space<vmem>>, vector<16x32xf32>
      tpu.vector_store %arg8[%c0_11, %c0_12], %12 {strides = array<i32>} : memref<16x32xf32, #tpu.memory_space<vmem>>, vector<16x32xf32>,
    } else {
    }
    %c0 = arith.constant 0 : index
    %c0_1 = arith.constant 0 : index
    %3 = vector.load %arg8[%c0, %c0_1] : memref<16x32xf32, #tpu.memory_space<vmem>>, vector<16x32xf32>
    %c0_2 = arith.constant 0 : index
    %c0_3 = arith.constant 0 : index
    %4 = vector.load %arg3[%c0_2, %c0_3] : memref<16x128xf32, #tpu.memory_space<vmem>>, vector<16x128xf32>
    %c0_4 = arith.constant 0 : index
    %c0_5 = arith.constant 0 : index
    %5 = vector.load %arg4[%c0_4, %c0_5] : memref<128x32xf32, #tpu.memory_space<vmem>>, vector<128x32xf32>
    %cst = arith.constant dense<0.000000e+00> : vector<16x32xf32>
    %6 = tpu.matmul %4, %5, %cst {dimension_numbers = #tpu.dot_dimension_numbers<[1], [0], [0], [1], [0, 0, 1, 1], [], []>} : vector<16x128xf32>, vector<128x32xf32>, vector<16x32xf32> -> vector<16x32xf32>
    %7 = arith.addf %3, %6 : vector<16x32xf32>
    %c0_6 = arith.constant 0 : index
    %c0_7 = arith.constant 0 : index
    %8 = vector.load %arg8[%c0_6, %c0_7] : memref<16x32xf32, #tpu.memory_space<vmem>>, vector<16x32xf32>
    tpu.vector_store %arg8[%c0_6, %c0_7], %7 {strides = array<i32>} : memref<16x32xf32, #tpu.memory_space<vmem>>, vector<16x32xf32>,
    %c0_i32_8 = arith.constant 0 : i32
    %9 = arith.cmpi eq, %arg2, %c0_i32_8 : i32
    %10 = arith.extui %9 : i1 to i32
    %c0_i32_9 = arith.constant 0 : i32
    %11 = arith.cmpi ne, %10, %c0_i32_9 : i32
    scf.if %11 {
      %c0_10 = arith.constant 0 : index
      %c0_11 = arith.constant 0 : index
      %12 = vector.load %arg8[%c0_10, %c0_11] : memref<16x32xf32, #tpu.memory_space<vmem>>, vector<16x32xf32>
      %c0_12 = arith.constant 0 : index
      %c0_13 = arith.constant 0 : index
      %13 = vector.load %arg5[%c0_12, %c0_13] : memref<1x32xf32, #tpu.memory_space<vmem>>, vector<1x32xf32>
      %14 = vector.broadcast %13 : vector<1x32xf32> to vector<16x32xf32>
      %15 = arith.addf %12, %14 : vector<16x32xf32>
      %c0_14 = arith.constant 0 : index
      %c0_15 = arith.constant 0 : index
      %16 = vector.load %arg6[%c0_14, %c0_15] : memref<16x32xf32, #tpu.memory_space<vmem>>, vector<16x32xf32>
      %17 = arith.addf %15, %16 : vector<16x32xf32>
      %c0_16 = arith.constant 0 : index
      %c0_17 = arith.constant 0 : index
      %18 = vector.load %arg7[%c0_16, %c0_17] : memref<16x32xf32, #tpu.memory_space<vmem>>, vector<16x32xf32>
      tpu.vector_store %arg7[%c0_16, %c0_17], %17 {strides = array<i32>} : memref<16x32xf32, #tpu.memory_space<vmem>>, vector<16x32xf32>,
    } else {
    }
    return
  }
  func.func @transform_0(%arg0: i32, %arg1: i32, %arg2: i32) -> (i32, i32) {
    %c0_i32 = arith.constant 0 : i32
    return %arg0, %arg2 : i32, i32
  }
  func.func @transform_1(%arg0: i32, %arg1: i32, %arg2: i32) -> (i32, i32) {
    %c0_i32 = arith.constant 0 : i32
    return %arg2, %arg1 : i32, i32
  }
  func.func @transform_2(%arg0: i32, %arg1: i32, %arg2: i32) -> (i32, i32) {
    %c0_i32 = arith.constant 0 : i32
    %c0_i32_0 = arith.constant 0 : i32
    return %c0_i32, %arg1 : i32, i32
  }
  func.func @transform_3(%arg0: i32, %arg1: i32, %arg2: i32) -> (i32, i32) {
    %c0_i32 = arith.constant 0 : i32
    return %arg0, %arg1 : i32, i32
  }
  func.func @transform_4(%arg0: i32, %arg1: i32, %arg2: i32) -> (i32, i32) {
    %c0_i32 = arith.constant 0 : i32
    return %arg0, %arg1 : i32, i32
  }
}

module attributes {stable_mosaic.version = 11 : i64} {
  func.func @kernel(%arg0: i32, %arg1: i32, %arg2: memref<16x32xf32, #tpu.memory_space<vmem>>, %arg3: memref<1x32xf32, #tpu.memory_space<vmem>>, %arg4: memref<1x32xf32, #tpu.memory_space<vmem>>, %arg5: memref<32x64xf32, #tpu.memory_space<vmem>>, %arg6: memref<16x64xf32, #tpu.memory_space<vmem>>) attributes {dimension_semantics = [#tpu.dimension_semantics<parallel>, #tpu.dimension_semantics<parallel>], iteration_bounds = array<i64: 1, 1>, scalar_prefetch = 0 : i64, scratch_operands = 0 : i64, tpu.core_type = #tpu.core_type<tc>, window_params = [{transform_indices = @transform_0, window_bounds = array<i64: 16, 32>}, {pipeline_mode = #tpu.pipeline_mode<synchronous>, transform_indices = @transform_1, window_bounds = array<i64: 1, 32>}, {pipeline_mode = #tpu.pipeline_mode<synchronous>, transform_indices = @transform_2, window_bounds = array<i64: 1, 32>}, {transform_indices = @transform_3, window_bounds = array<i64: 32, 64>}, {transform_indices = @transform_4, window_bounds = array<i64: 16, 64>}]} {
    %c0 = arith.constant 0 : index
    %c0_0 = arith.constant 0 : index
    %0 = vector.load %arg2[%c0, %c0_0] : memref<16x32xf32, #tpu.memory_space<vmem>>, vector<16x32xf32>
    %cst = arith.constant dense<0.000000e+00> : vector<16xf32>
    %1 = vector.multi_reduction <add>, %0, %cst [1] : vector<16x32xf32> to vector<16xf32>
    %2 = vector.shape_cast %1 : vector<16xf32> to vector<16x1xf32>
    %cst_1 = arith.constant 3.200000e+01 : f32
    %3 = vector.broadcast %cst_1 : f32 to vector<16x1xf32>
    %4 = arith.divf %2, %3 : vector<16x1xf32>
    %5 = vector.broadcast %4 : vector<16x1xf32> to vector<16x32xf32>
    %6 = arith.subf %0, %5 : vector<16x32xf32>
    %7 = arith.mulf %6, %6 : vector<16x32xf32>
    %cst_2 = arith.constant dense<0.000000e+00> : vector<16xf32>
    %8 = vector.multi_reduction <add>, %7, %cst_2 [1] : vector<16x32xf32> to vector<16xf32>
    %9 = vector.shape_cast %8 : vector<16xf32> to vector<16x1xf32>
    %cst_3 = arith.constant 3.200000e+01 : f32
    %10 = vector.broadcast %cst_3 : f32 to vector<16x1xf32>
    %11 = arith.divf %9, %10 : vector<16x1xf32>
    %12 = vector.broadcast %4 : vector<16x1xf32> to vector<16x32xf32>
    %13 = arith.subf %0, %12 : vector<16x32xf32>
    %cst_4 = arith.constant 9.99999974E-6 : f32
    %14 = vector.broadcast %cst_4 : f32 to vector<16x1xf32>
    %15 = arith.addf %11, %14 : vector<16x1xf32>
    %16 = math.rsqrt %15 : vector<16x1xf32>
    %17 = vector.broadcast %16 : vector<16x1xf32> to vector<16x32xf32>
    %18 = arith.mulf %13, %17 : vector<16x32xf32>
    %c0_5 = arith.constant 0 : index
    %c0_6 = arith.constant 0 : index
    %19 = vector.load %arg3[%c0_5, %c0_6] : memref<1x32xf32, #tpu.memory_space<vmem>>, vector<1x32xf32>
    %20 = vector.broadcast %19 : vector<1x32xf32> to vector<16x32xf32>
    %21 = arith.mulf %18, %20 : vector<16x32xf32>
    %c0_7 = arith.constant 0 : index
    %c0_8 = arith.constant 0 : index
    %22 = vector.load %arg4[%c0_7, %c0_8] : memref<1x32xf32, #tpu.memory_space<vmem>>, vector<1x32xf32>
    %23 = vector.broadcast %22 : vector<1x32xf32> to vector<16x32xf32>
    %24 = arith.addf %21, %23 : vector<16x32xf32>
    %c0_9 = arith.constant 0 : index
    %c0_10 = arith.constant 0 : index
    %25 = vector.load %arg5[%c0_9, %c0_10] : memref<32x64xf32, #tpu.memory_space<vmem>>, vector<32x64xf32>
    %cst_11 = arith.constant dense<0.000000e+00> : vector<16x64xf32>
    %26 = tpu.matmul %24, %25, %cst_11 {dimension_numbers = #tpu.dot_dimension_numbers<[1], [0], [0], [1], [0, 0, 1, 1], [], []>} : vector<16x32xf32>, vector<32x64xf32>, vector<16x64xf32> -> vector<16x64xf32>
    %c0_12 = arith.constant 0 : index
    %c0_13 = arith.constant 0 : index
    %27 = vector.load %arg6[%c0_12, %c0_13] : memref<16x64xf32, #tpu.memory_space<vmem>>, vector<16x64xf32>
    tpu.vector_store %arg6[%c0_12, %c0_13], %26 {strides = array<i32>} : memref<16x64xf32, #tpu.memory_space<vmem>>, vector<16x64xf32>,
    return
  }
  func.func @transform_0(%arg0: i32, %arg1: i32) -> (i32, i32) {
    %c0_i32 = arith.constant 0 : i32
    %c0_i32_0 = arith.constant 0 : i32
    return %arg0, %c0_i32 : i32, i32
  }
  func.func @transform_1(%arg0: i32, %arg1: i32) -> (i32, i32) {
    %c0_i32 = arith.constant 0 : i32
    %c0_i32_0 = arith.constant 0 : i32
    %c0_i32_1 = arith.constant 0 : i32
    return %c0_i32, %c0_i32_0 : i32, i32
  }
  func.func @transform_2(%arg0: i32, %arg1: i32) -> (i32, i32) {
    %c0_i32 = arith.constant 0 : i32
    %c0_i32_0 = arith.constant 0 : i32
    %c0_i32_1 = arith.constant 0 : i32
    return %c0_i32, %c0_i32_0 : i32, i32
  }
  func.func @transform_3(%arg0: i32, %arg1: i32) -> (i32, i32) {
    %c0_i32 = arith.constant 0 : i32
    %c0_i32_0 = arith.constant 0 : i32
    return %c0_i32, %arg1 : i32, i32
  }
  func.func @transform_4(%arg0: i32, %arg1: i32) -> (i32, i32) {
    %c0_i32 = arith.constant 0 : i32
    return %arg0, %arg1 : i32, i32
  }
}

</mosaic_0001>

<llo_original>
// kernel: gpt_forward.13
$region0: #{gpt_forward.13}
  #allocation0 [shape = 'u32[]', space=smem, size = 0x4, offset = 0x4, fixed_abs, tag = 'smem constant byte address 0x4 - core index']
  #allocation1 [shape = 'u32[144,128]{1,0:T(1,128)}', space=vmem, size = 0x12000, scoped, tag = 'internal scratch']
  #allocation2 [shape = 'f32[16,32]{1,0:T(8,128)}', space=vmem, size = 0x2000, scoped, tag = 'scratch operand']
  %s0 = inlined_call_operand.vmem [shape: f32[16,32], index: 0, kind: input, shape index: {}]
  %s1 = inlined_call_operand.vmem [shape: f32[32,32], index: 1, kind: input, shape index: {}]
  %s2 = inlined_call_operand.vmem [shape: f32[1,32], index: 2, kind: input, shape index: {}]
  %s3 = inlined_call_operand.vmem [shape: f32[16,32], index: 3, kind: input, shape index: {}]
  %s4 = inlined_call_operand.vmem [shape: f32[16,32], index: 4, kind: output, shape index: {}]
  %s5 = sld [smem:[#allocation0]]
  $region34: #{gpt_forward.13} parent=0
    _
  %s7 = ssub.s32 1, %s5
  %s8 = scalar_select 0, %s7, %s5
  // Predicated region
  $region2: #{gpt_forward.13} parent=0 // pred_check
    _
  $region3: #{gpt_forward.13} parent=0 // pred_check_branch
    %10 = sbr.rel (0) target = $region5
  $region4: #{gpt_forward.13} parent=0 // pred_region
    _
  $region5: #{gpt_forward.13} parent=0 // pred_fallthru
    _
  // Predicated region
  $region6: #{gpt_forward.13} parent=0 // pred_check
    _
  $region7: #{gpt_forward.13} parent=0 // pred_check_branch
    %12 = sbr.rel (0) target = $region9
  $region8: #{gpt_forward.13} parent=0 // pred_region
    _
  $region9: #{gpt_forward.13} parent=0 // pred_fallthru
    _
  // Predicated region
  $region10: #{gpt_forward.13} parent=0 // pred_check
    _
  $region11: #{gpt_forward.13} parent=0 // pred_check_branch
    %14 = sbr.rel (0) target = $region13
  $region12: #{gpt_forward.13} parent=0 // pred_region
    _
  $region13: #{gpt_forward.13} parent=0 // pred_fallthru
    _
  // Predicated region
  $region14: #{gpt_forward.13} parent=0 // pred_check
    _
  $region15: #{gpt_forward.13} parent=0 // pred_check_branch
    %16 = sbr.rel (0) target = $region17
  $region16: #{gpt_forward.13} parent=0 // pred_region
    _
  $region17: #{gpt_forward.13} parent=0 // pred_fallthru
    _
  %p17 = scmp.eq.s32.totalorder 0, 0
  // Predicated region
  $region18: #{gpt_forward.13} parent=0 // pred_check
    %p18 = pneg %p17
  $region19: #{gpt_forward.13} parent=0 // pred_check_branch
    %20 = sbr.rel (%p18) target = $region21
  $region20: #{gpt_forward.13} parent=0 // pred_region
    %vm21 = vcmask 261120
    %22 = vst.msk [vmem:[#allocation2] sm:$0xff] %vm21, 0.0
    %23 = vst.msk [vmem:[#allocation2 + $0x8] sm:$0xff] %vm21, 0.0
  $region21: #{gpt_forward.13} parent=0 // pred_fallthru
    _
  %v24 = vld [vmem:[#allocation2] sm:$0xff]
  %v25 = vld [vmem:[#allocation2 + $0x8] sm:$0xff]
  %v26 = vld [vmem:[%s0] sm:$0xff]
  %v27 = vld [vmem:[%s0 + $0x8] sm:$0xff]
  %v28 = vld [vmem:[%s1] sm:$0xff]
  %v29 = vld [vmem:[%s1 + $0x8] sm:$0xff]
  %v30 = vld [vmem:[%s1 + $0x10] sm:$0xff]
  %v31 = vld [vmem:[%s1 + $0x18] sm:$0xff]
  %vm32 = vcmask 261120
  %v34 = vsel %vm32, %v26, 0
  %v37 = vsel %vm32, %v27, 0
  %39 = vmatprep.subr.mxu0 0.0
  %40 = vmatpush1.msra.mxu0 %v28
  %41 = vmatprep.subr.mxu0 0.0
  %42 = vmatpush1.msra.mxu0 %v29
  %43 = vmatprep.subr.mxu0 0.0
  %44 = vmatpush1.msra.mxu0 %v30
  %45 = vmatprep.subr.mxu0 0.0
  %46 = vmatpush1.msra.mxu0 %v31
  %47 = vmatprep.subr.mxu0 0.0
  %48 = vmatpush1.msra.mxu0 0.0
  %49 = vmatprep.subr.mxu0 0.0
  %50 = vmatpush1.msra.mxu0 0.0
  %51 = vmatprep.subr.mxu0 0.0
  %52 = vmatpush1.msra.mxu0 0.0
  %53 = vmatprep.subr.mxu0 0.0
  %54 = vmatpush1.msra.mxu0 0.0
  %55 = vmatprep.subr.mxu0 0.0
  %56 = vmatpush1.msra.mxu0 0.0
  %57 = vmatprep.subr.mxu0 0.0
  %58 = vmatpush1.msra.mxu0 0.0
  %59 = vmatprep.subr.mxu0 0.0
  %60 = vmatpush1.msra.mxu0 0.0
  %61 = vmatprep.subr.mxu0 0.0
  %62 = vmatpush1.msra.mxu0 0.0
  %63 = vmatprep.subr.mxu0 0.0
  %64 = vmatpush1.msra.mxu0 0.0
  %65 = vmatprep.subr.mxu0 0.0
  %66 = vmatpush1.msra.mxu0 0.0
  %67 = vmatprep.subr.mxu0 0.0
  %68 = vmatpush1.msra.mxu0 0.0
  %69 = vmatprep.subr.mxu0 0.0
  %70 = vmatpush1.msra.mxu0 0.0
  %71 = vmatprep.subr.mxu0 0.0
  %72 = vmatpush1.msra.mxu0 0.0
  %73 = vmatprep.subr.mxu0 0.0
  %74 = vmatpush1.msra.mxu0 0.0
  %75 = vmatprep.subr.mxu0 0.0
  %76 = vmatpush1.msra.mxu0 0.0
  %77 = vmatprep.subr.mxu0 0.0
  %78 = vmatpush1.msra.mxu0 0.0
  %79 = vmatprep.subr.mxu0 0.0
  %80 = vmatpush1.msra.mxu0 0.0
  %81 = vmatprep.subr.mxu0 0.0
  %82 = vmatpush1.msra.mxu0 0.0
  %83 = vmatprep.subr.mxu0 0.0
  %84 = vmatpush1.msra.mxu0 0.0
  %85 = vmatprep.subr.mxu0 0.0
  %86 = vmatpush1.msra.mxu0 0.0
  %87 = vmatprep.subr.mxu0 0.0
  %88 = vmatpush1.msra.mxu0 0.0
  %89 = vmatprep.subr.mxu0 0.0
  %90 = vmatpush1.msra.mxu0 0.0
  %91 = vmatprep.subr.mxu0 0.0
  %92 = vmatpush1.msra.mxu0 0.0
  %93 = vmatprep.subr.mxu0 0.0
  %94 = vmatpush1.msra.mxu0 0.0
  %95 = vmatprep.subr.mxu0 0.0
  %96 = vmatpush1.msra.mxu0 0.0
  %97 = vmatprep.subr.mxu0 0.0
  %98 = vmatpush1.msra.mxu0 0.0
  %99 = vmatprep.subr.mxu0 0.0
  %100 = vmatpush1.msra.mxu0 0.0
  %101 = vmatprep.subr.mxu0 0.0
  %102 = vmatpush1.msra.mxu0 0.0
  %103 = vmatprep.mubr.f32.mxu0 0.0
  %104 = vmatmul.mubr.f32.gmra.mrb[0].mxu0 %v34
  %v105 = vpop.f32.mrb[0].mxu0
  %v106 = vadd.f32 0.0, %v105
  %v107 = vpop.f32.mrb[0].mxu0
  %108 = vmatprep.mubr.f32.mxu0 0.0
  %109 = vmatmul.mubr.f32.gmra.mrb[0].mxu0 %v37
  %v110 = vpop.f32.mrb[0].mxu0
  %v111 = vadd.f32 0.0, %v110
  %v112 = vpop.f32.mrb[0].mxu0
  %113 = vdwg.mxu0
  %v114 = vadd.f32 %v24, %v106
  %v115 = vadd.f32 %v25, %v111
  %116 = vst.msk [vmem:[#allocation2] sm:$0xff] %vm32, %v114
  %117 = vst.msk [vmem:[#allocation2 + $0x8] sm:$0xff] %vm32, %v115
  // Predicated region
  $region22: #{gpt_forward.13} parent=0 // pred_check
    %p118 = pneg %p17
  $region23: #{gpt_forward.13} parent=0 // pred_check_branch
    %120 = sbr.rel (%p118) target = $region25
  $region24: #{gpt_forward.13} parent=0 // pred_region
    %v121 = vld [vmem:[#allocation2] sm:$0xff]
    %v122 = vld [vmem:[#allocation2 + $0x8] sm:$0xff]
    %v123 = vld [vmem:[%s2] sm:$0x1]
    %v125 = vlaneseq
    %v126 = vshrl.u32 %v125, 7
    %v127 = vsub.s32 0, %v126
    %v128 = vrot.slane %v123, %v127
    %v130 = vadd.f32 %v121, %v128
    %v131 = vadd.f32 %v122, %v128
    %v132 = vld [vmem:[%s3] sm:$0xff]
    %v133 = vld [vmem:[%s3 + $0x8] sm:$0xff]
    %v134 = vadd.f32 %v130, %v132
    %v135 = vadd.f32 %v131, %v133
    %136 = vst.msk [vmem:[%s4] sm:$0xff] %vm32, %v134
    %137 = vst.msk [vmem:[%s4 + $0x8] sm:$0xff] %vm32, %v135
  $region25: #{gpt_forward.13} parent=0 // pred_fallthru
    _
  // Predicated region
  $region26: #{gpt_forward.13} parent=0 // pred_check
    _
  $region27: #{gpt_forward.13} parent=0 // pred_check_branch
    %139 = sbr.rel (0) target = $region29
  $region28: #{gpt_forward.13} parent=0 // pred_region
    _
  $region29: #{gpt_forward.13} parent=0 // pred_fallthru
    _
  // Predicated region
  $region30: #{gpt_forward.13} parent=0 // pred_check
    _
  $region31: #{gpt_forward.13} parent=0 // pred_check_branch
    %141 = sbr.rel (0) target = $region33
  $region32: #{gpt_forward.13} parent=0 // pred_region
    _
  $region33: #{gpt_forward.13} parent=0 // pred_fallthru
    _

// kernel: gpt_forward.11
$region0: #{gpt_forward.11}
  #allocation0 [shape = 'u32[]', space=smem, size = 0x4, offset = 0x4, fixed_abs, tag = 'smem constant byte address 0x4 - core index']
  #allocation1 [shape = 'u32[144,128]{1,0:T(1,128)}', space=vmem, size = 0x12000, scoped, tag = 'internal scratch']
  %s0 = inlined_call_operand.vmem [shape: f32[16,32], index: 0, kind: input, shape index: {}]
  %s1 = inlined_call_operand.vmem [shape: f32[1,32], index: 1, kind: input, shape index: {}]
  %s2 = inlined_call_operand.vmem [shape: f32[1,32], index: 2, kind: input, shape index: {}]
  %s3 = inlined_call_operand.vmem [shape: f32[32,96], index: 3, kind: input, shape index: {}]
  %s4 = inlined_call_operand.vmem [shape: f32[16,96], index: 4, kind: output, shape index: {}]
  %s5 = sld [smem:[#allocation0]]
  $region26: #{gpt_forward.11} parent=0
    _
  %s7 = ssub.s32 1, %s5
  %s8 = scalar_select 0, %s7, %s5
  // Predicated region
  $region2: #{gpt_forward.11} parent=0 // pred_check
    _
  $region3: #{gpt_forward.11} parent=0 // pred_check_branch
    %10 = sbr.rel (0) target = $region5
  $region4: #{gpt_forward.11} parent=0 // pred_region
    _
  $region5: #{gpt_forward.11} parent=0 // pred_fallthru
    _
  // Predicated region
  $region6: #{gpt_forward.11} parent=0 // pred_check
    _
  $region7: #{gpt_forward.11} parent=0 // pred_check_branch
    %12 = sbr.rel (0) target = $region9
  $region8: #{gpt_forward.11} parent=0 // pred_region
    _
  $region9: #{gpt_forward.11} parent=0 // pred_fallthru
    _
  // Predicated region
  $region10: #{gpt_forward.11} parent=0 // pred_check
    _
  $region11: #{gpt_forward.11} parent=0 // pred_check_branch
    %14 = sbr.rel (0) target = $region13
  $region12: #{gpt_forward.11} parent=0 // pred_region
    _
  $region13: #{gpt_forward.11} parent=0 // pred_fallthru
    _
  // Predicated region
  $region14: #{gpt_forward.11} parent=0 // pred_check
    _
  $region15: #{gpt_forward.11} parent=0 // pred_check_branch
    %16 = sbr.rel (0) target = $region17
  $region16: #{gpt_forward.11} parent=0 // pred_region
    _
  $region17: #{gpt_forward.11} parent=0 // pred_fallthru
    _
  %v17 = vld [vmem:[%s0] sm:$0xff]
  %v18 = vld [vmem:[%s0 + $0x8] sm:$0xff]
  %vm19 = vcmask 261120
  %v20 = vsel %vm19, %v17, 0.0
  %21 = vadd.xlane.f32.xlu0 %v20
  %v22 = vpop.xlane.xlu0 %21
  %v23 = vsel %vm19, %v18, 0.0
  %24 = vadd.xlane.f32.xlu0 %v23
  %v25 = vpop.xlane.xlu0 %24
  %v26 = vrcp.pop 32.0
  %v27 = vmul.f32 %v22, %v26
  %v28 = vmul.f32 %v25, %v26
  %v29 = vsub.f32 %v17, %v27
  %v30 = vsub.f32 %v18, %v28
  %v31 = vmul.f32 %v29, %v29
  %v32 = vmul.f32 %v30, %v30
  %v33 = vsel %vm19, %v31, 0.0
  %34 = vadd.xlane.f32.xlu0 %v33
  %v35 = vpop.xlane.xlu0 %34
  %v36 = vsel %vm19, %v32, 0.0
  %37 = vadd.xlane.f32.xlu0 %v36
  %v38 = vpop.xlane.xlu0 %37
  %v39 = vmul.f32 %v35, %v26
  %v40 = vmul.f32 %v38, %v26
  %v41 = vadd.f32 %v39, 1e-05
  %v42 = vadd.f32 %v40, 1e-05
  %v43 = vrsqrt.pop %v41
  %v44 = vrsqrt.pop %v42
  %v45 = vmul.f32 %v29, %v43
  %v46 = vmul.f32 %v30, %v44
  %v47 = vld [vmem:[%s1] sm:$0x1]
  %v49 = vlaneseq
  %v50 = vshrl.u32 %v49, 7
  %v51 = vsub.s32 0, %v50
  %v52 = vrot.slane %v47, %v51
  %v54 = vmul.f32 %v45, %v52
  %v55 = vmul.f32 %v46, %v52
  %v56 = vld [vmem:[%s2] sm:$0x1]
  %v58 = vlaneseq
  %v59 = vshrl.u32 %v58, 7
  %v60 = vsub.s32 0, %v59
  %v61 = vrot.slane %v56, %v60
  %v63 = vadd.f32 %v54, %v61
  %v64 = vadd.f32 %v55, %v61
  %v65 = vld [vmem:[%s3] sm:$0xff]
  %v66 = vld [vmem:[%s3 + $0x8] sm:$0xff]
  %v67 = vld [vmem:[%s3 + $0x10] sm:$0xff]
  %v68 = vld [vmem:[%s3 + $0x18] sm:$0xff]
  %v70 = vsel %vm19, %v63, 0
  %v73 = vsel %vm19, %v64, 0
  %75 = vmatprep.subr.mxu0 0.0
  %76 = vmatpush1.msra.mxu0 %v65
  %77 = vmatprep.subr.mxu0 0.0
  %78 = vmatpush1.msra.mxu0 %v66
  %79 = vmatprep.subr.mxu0 0.0
  %80 = vmatpush1.msra.mxu0 %v67
  %81 = vmatprep.subr.mxu0 0.0
  %82 = vmatpush1.msra.mxu0 %v68
  %83 = vmatprep.subr.mxu0 0.0
  %84 = vmatpush1.msra.mxu0 0.0
  %85 = vmatprep.subr.mxu0 0.0
  %86 = vmatpush1.msra.mxu0 0.0
  %87 = vmatprep.subr.mxu0 0.0
  %88 = vmatpush1.msra.mxu0 0.0
  %89 = vmatprep.subr.mxu0 0.0
  %90 = vmatpush1.msra.mxu0 0.0
  %91 = vmatprep.subr.mxu0 0.0
  %92 = vmatpush1.msra.mxu0 0.0
  %93 = vmatprep.subr.mxu0 0.0
  %94 = vmatpush1.msra.mxu0 0.0
  %95 = vmatprep.subr.mxu0 0.0
  %96 = vmatpush1.msra.mxu0 0.0
  %97 = vmatprep.subr.mxu0 0.0
  %98 = vmatpush1.msra.mxu0 0.0
  %99 = vmatprep.subr.mxu0 0.0
  %100 = vmatpush1.msra.mxu0 0.0
  %101 = vmatprep.subr.mxu0 0.0
  %102 = vmatpush1.msra.mxu0 0.0
  %103 = vmatprep.subr.mxu0 0.0
  %104 = vmatpush1.msra.mxu0 0.0
  %105 = vmatprep.subr.mxu0 0.0
  %106 = vmatpush1.msra.mxu0 0.0
  %107 = vmatprep.subr.mxu0 0.0
  %108 = vmatpush1.msra.mxu0 0.0
  %109 = vmatprep.subr.mxu0 0.0
  %110 = vmatpush1.msra.mxu0 0.0
  %111 = vmatprep.subr.mxu0 0.0
  %112 = vmatpush1.msra.mxu0 0.0
  %113 = vmatprep.subr.mxu0 0.0
  %114 = vmatpush1.msra.mxu0 0.0
  %115 = vmatprep.subr.mxu0 0.0
  %116 = vmatpush1.msra.mxu0 0.0
  %117 = vmatprep.subr.mxu0 0.0
  %118 = vmatpush1.msra.mxu0 0.0
  %119 = vmatprep.subr.mxu0 0.0
  %120 = vmatpush1.msra.mxu0 0.0
  %121 = vmatprep.subr.mxu0 0.0
  %122 = vmatpush1.msra.mxu0 0.0
  %123 = vmatprep.subr.mxu0 0.0
  %124 = vmatpush1.msra.mxu0 0.0
  %125 = vmatprep.subr.mxu0 0.0
  %126 = vmatpush1.msra.mxu0 0.0
  %127 = vmatprep.subr.mxu0 0.0
  %128 = vmatpush1.msra.mxu0 0.0
  %129 = vmatprep.subr.mxu0 0.0
  %130 = vmatpush1.msra.mxu0 0.0
  %131 = vmatprep.subr.mxu0 0.0
  %132 = vmatpush1.msra.mxu0 0.0
  %133 = vmatprep.subr.mxu0 0.0
  %134 = vmatpush1.msra.mxu0 0.0
  %135 = vmatprep.subr.mxu0 0.0
  %136 = vmatpush1.msra.mxu0 0.0
  %137 = vmatprep.subr.mxu0 0.0
  %138 = vmatpush1.msra.mxu0 0.0
  %139 = vmatprep.mubr.f32.mxu0 0.0
  %140 = vmatmul.mubr.f32.gmra.mrb[0].mxu0 %v70
  %v141 = vpop.f32.mrb[0].mxu0
  %v142 = vadd.f32 0.0, %v141
  %v143 = vpop.f32.mrb[0].mxu0
  %144 = vmatprep.mubr.f32.mxu0 0.0
  %145 = vmatmul.mubr.f32.gmra.mrb[0].mxu0 %v73
  %v146 = vpop.f32.mrb[0].mxu0
  %v147 = vadd.f32 0.0, %v146
  %v148 = vpop.f32.mrb[0].mxu0
  %149 = vdwg.mxu0
  %vm150 = vcmask 785408
  %151 = vst.msk [vmem:[%s4] sm:$0xff] %vm150, %v142
  %152 = vst.msk [vmem:[%s4 + $0x8] sm:$0xff] %vm150, %v147
  // Predicated region
  $region18: #{gpt_forward.11} parent=0 // pred_check
    _
  $region19: #{gpt_forward.11} parent=0 // pred_check_branch
    %154 = sbr.rel (0) target = $region21
  $region20: #{gpt_forward.11} parent=0 // pred_region
    _
  $region21: #{gpt_forward.11} parent=0 // pred_fallthru
    _
  // Predicated region
  $region22: #{gpt_forward.11} parent=0 // pred_check
    _
  $region23: #{gpt_forward.11} parent=0 // pred_check_branch
    %156 = sbr.rel (0) target = $region25
  $region24: #{gpt_forward.11} parent=0 // pred_region
    _
  $region25: #{gpt_forward.11} parent=0 // pred_fallthru
    _

// kernel: gpt_forward.14
$region0: #{gpt_forward.14}
  #allocation0 [shape = 'u32[]', space=smem, size = 0x4, offset = 0x4, fixed_abs, tag = 'smem constant byte address 0x4 - core index']
  #allocation1 [shape = 'u32[144,128]{1,0:T(1,128)}', space=vmem, size = 0x12000, scoped, tag = 'internal scratch']
  %s0 = inlined_call_operand.vmem [shape: f32[16,32], index: 0, kind: input, shape index: {}]
  %s1 = inlined_call_operand.vmem [shape: f32[1,32], index: 1, kind: input, shape index: {}]
  %s2 = inlined_call_operand.vmem [shape: f32[1,32], index: 2, kind: input, shape index: {}]
  %s3 = inlined_call_operand.vmem [shape: f32[32,128], index: 3, kind: input, shape index: {}]
  %s4 = inlined_call_operand.vmem [shape: f32[1,128], index: 4, kind: input, shape index: {}]
  %s5 = inlined_call_operand.vmem [shape: f32[16,128], index: 5, kind: output, shape index: {}]
  %s6 = sld [smem:[#allocation0]]
  $region30: #{gpt_forward.14} parent=0
    _
  %s8 = ssub.s32 1, %s6
  %s9 = scalar_select 0, %s8, %s6
  // Predicated region
  $region2: #{gpt_forward.14} parent=0 // pred_check
    _
  $region3: #{gpt_forward.14} parent=0 // pred_check_branch
    %11 = sbr.rel (0) target = $region5
  $region4: #{gpt_forward.14} parent=0 // pred_region
    _
  $region5: #{gpt_forward.14} parent=0 // pred_fallthru
    _
  // Predicated region
  $region6: #{gpt_forward.14} parent=0 // pred_check
    _
  $region7: #{gpt_forward.14} parent=0 // pred_check_branch
    %13 = sbr.rel (0) target = $region9
  $region8: #{gpt_forward.14} parent=0 // pred_region
    _
  $region9: #{gpt_forward.14} parent=0 // pred_fallthru
    _
  // Predicated region
  $region10: #{gpt_forward.14} parent=0 // pred_check
    _
  $region11: #{gpt_forward.14} parent=0 // pred_check_branch
    %15 = sbr.rel (0) target = $region13
  $region12: #{gpt_forward.14} parent=0 // pred_region
    _
  $region13: #{gpt_forward.14} parent=0 // pred_fallthru
    _
  // Predicated region
  $region14: #{gpt_forward.14} parent=0 // pred_check
    _
  $region15: #{gpt_forward.14} parent=0 // pred_check_branch
    %17 = sbr.rel (0) target = $region17
  $region16: #{gpt_forward.14} parent=0 // pred_region
    _
  $region17: #{gpt_forward.14} parent=0 // pred_fallthru
    _
  // Predicated region
  $region18: #{gpt_forward.14} parent=0 // pred_check
    _
  $region19: #{gpt_forward.14} parent=0 // pred_check_branch
    %19 = sbr.rel (0) target = $region21
  $region20: #{gpt_forward.14} parent=0 // pred_region
    _
  $region21: #{gpt_forward.14} parent=0 // pred_fallthru
    _
  %v20 = vld [vmem:[%s0] sm:$0xff]
  %v21 = vld [vmem:[%s0 + $0x8] sm:$0xff]
  %vm22 = vcmask 261120
  %v23 = vsel %vm22, %v20, 0.0
  %24 = vadd.xlane.f32.xlu0 %v23
  %v25 = vpop.xlane.xlu0 %24
  %v26 = vsel %vm22, %v21, 0.0
  %27 = vadd.xlane.f32.xlu0 %v26
  %v28 = vpop.xlane.xlu0 %27
  %v29 = vrcp.pop 32.0
  %v30 = vmul.f32 %v25, %v29
  %v31 = vmul.f32 %v28, %v29
  %v32 = vsub.f32 %v20, %v30
  %v33 = vsub.f32 %v21, %v31
  %v34 = vmul.f32 %v32, %v32
  %v35 = vmul.f32 %v33, %v33
  %v36 = vsel %vm22, %v34, 0.0
  %37 = vadd.xlane.f32.xlu0 %v36
  %v38 = vpop.xlane.xlu0 %37
  %v39 = vsel %vm22, %v35, 0.0
  %40 = vadd.xlane.f32.xlu0 %v39
  %v41 = vpop.xlane.xlu0 %40
  %v42 = vmul.f32 %v38, %v29
  %v43 = vmul.f32 %v41, %v29
  %v44 = vadd.f32 %v42, 1e-05
  %v45 = vadd.f32 %v43, 1e-05
  %v46 = vrsqrt.pop %v44
  %v47 = vrsqrt.pop %v45
  %v48 = vmul.f32 %v32, %v46
  %v49 = vmul.f32 %v33, %v47
  %v50 = vld [vmem:[%s1] sm:$0x1]
  %v52 = vlaneseq
  %v53 = vshrl.u32 %v52, 7
  %v54 = vsub.s32 0, %v53
  %v55 = vrot.slane %v50, %v54
  %v57 = vmul.f32 %v48, %v55
  %v58 = vmul.f32 %v49, %v55
  %v59 = vld [vmem:[%s2] sm:$0x1]
  %v61 = vlaneseq
  %v62 = vshrl.u32 %v61, 7
  %v63 = vsub.s32 0, %v62
  %v64 = vrot.slane %v59, %v63
  %v66 = vadd.f32 %v57, %v64
  %v67 = vadd.f32 %v58, %v64
  %v68 = vld [vmem:[%s3] sm:$0xff]
  %v69 = vld [vmem:[%s3 + $0x8] sm:$0xff]
  %v70 = vld [vmem:[%s3 + $0x10] sm:$0xff]
  %v71 = vld [vmem:[%s3 + $0x18] sm:$0xff]
  %v72 = vld [vmem:[%s4] sm:$0x1]
  %v74 = vlaneseq
  %v75 = vshrl.u32 %v74, 7
  %v76 = vsub.s32 0, %v75
  %v77 = vrot.slane %v72, %v76
  %v80 = vsel %vm22, %v66, 0
  %v83 = vsel %vm22, %v67, 0
  %85 = vmatprep.subr.mxu0 0.0
  %86 = vmatpush1.msra.mxu0 %v68
  %87 = vmatprep.subr.mxu0 0.0
  %88 = vmatpush1.msra.mxu0 %v69
  %89 = vmatprep.subr.mxu0 0.0
  %90 = vmatpush1.msra.mxu0 %v70
  %91 = vmatprep.subr.mxu0 0.0
  %92 = vmatpush1.msra.mxu0 %v71
  %93 = vmatprep.subr.mxu0 0.0
  %94 = vmatpush1.msra.mxu0 0.0
  %95 = vmatprep.subr.mxu0 0.0
  %96 = vmatpush1.msra.mxu0 0.0
  %97 = vmatprep.subr.mxu0 0.0
  %98 = vmatpush1.msra.mxu0 0.0
  %99 = vmatprep.subr.mxu0 0.0
  %100 = vmatpush1.msra.mxu0 0.0
  %101 = vmatprep.subr.mxu0 0.0
  %102 = vmatpush1.msra.mxu0 0.0
  %103 = vmatprep.subr.mxu0 0.0
  %104 = vmatpush1.msra.mxu0 0.0
  %105 = vmatprep.subr.mxu0 0.0
  %106 = vmatpush1.msra.mxu0 0.0
  %107 = vmatprep.subr.mxu0 0.0
  %108 = vmatpush1.msra.mxu0 0.0
  %109 = vmatprep.subr.mxu0 0.0
  %110 = vmatpush1.msra.mxu0 0.0
  %111 = vmatprep.subr.mxu0 0.0
  %112 = vmatpush1.msra.mxu0 0.0
  %113 = vmatprep.subr.mxu0 0.0
  %114 = vmatpush1.msra.mxu0 0.0
  %115 = vmatprep.subr.mxu0 0.0
  %116 = vmatpush1.msra.mxu0 0.0
  %117 = vmatprep.subr.mxu0 0.0
  %118 = vmatpush1.msra.mxu0 0.0
  %119 = vmatprep.subr.mxu0 0.0
  %120 = vmatpush1.msra.mxu0 0.0
  %121 = vmatprep.subr.mxu0 0.0
  %122 = vmatpush1.msra.mxu0 0.0
  %123 = vmatprep.subr.mxu0 0.0
  %124 = vmatpush1.msra.mxu0 0.0
  %125 = vmatprep.subr.mxu0 0.0
  %126 = vmatpush1.msra.mxu0 0.0
  %127 = vmatprep.subr.mxu0 0.0
  %128 = vmatpush1.msra.mxu0 0.0
  %129 = vmatprep.subr.mxu0 0.0
  %130 = vmatpush1.msra.mxu0 0.0
  %131 = vmatprep.subr.mxu0 0.0
  %132 = vmatpush1.msra.mxu0 0.0
  %133 = vmatprep.subr.mxu0 0.0
  %134 = vmatpush1.msra.mxu0 0.0
  %135 = vmatprep.subr.mxu0 0.0
  %136 = vmatpush1.msra.mxu0 0.0
  %137 = vmatprep.subr.mxu0 0.0
  %138 = vmatpush1.msra.mxu0 0.0
  %139 = vmatprep.subr.mxu0 0.0
  %140 = vmatpush1.msra.mxu0 0.0
  %141 = vmatprep.subr.mxu0 0.0
  %142 = vmatpush1.msra.mxu0 0.0
  %143 = vmatprep.subr.mxu0 0.0
  %144 = vmatpush1.msra.mxu0 0.0
  %145 = vmatprep.subr.mxu0 0.0
  %146 = vmatpush1.msra.mxu0 0.0
  %147 = vmatprep.subr.mxu0 0.0
  %148 = vmatpush1.msra.mxu0 0.0
  %149 = vmatprep.mubr.f32.mxu0 0.0
  %150 = vmatmul.mubr.f32.gmra.mrb[0].mxu0 %v80
  %v151 = vpop.f32.mrb[0].mxu0
  %v152 = vadd.f32 %v77, %v151
  %v153 = vpop.f32.mrb[0].mxu0
  %154 = vmatprep.mubr.f32.mxu0 0.0
  %155 = vmatmul.mubr.f32.gmra.mrb[0].mxu0 %v83
  %v156 = vpop.f32.mrb[0].mxu0
  %v157 = vadd.f32 %v77, %v156
  %v158 = vpop.f32.mrb[0].mxu0
  %159 = vdwg.mxu0
  %v160 = vmul.f32 %v152, 0.5
  %v161 = vmul.f32 %v157, 0.5
  %v162 = vmul.f32 %v152, 0.044715
  %v163 = vmul.f32 %v157, 0.044715
  %v164 = vmul.f32 %v162, %v152
  %v165 = vmul.f32 %v163, %v157
  %v166 = vmul.f32 %v164, %v152
  %v167 = vmul.f32 %v165, %v157
  %v168 = vadd.f32 %v152, %v166
  %v169 = vadd.f32 %v157, %v167
  %v170 = vmul.f32 %v168, 0.7978846
  %v171 = vmul.f32 %v169, 0.7978846
  %v172 = vtanh.pop %v170
  %v173 = vtanh.pop %v171
  %v174 = vadd.f32 %v172, 1.0
  %v175 = vadd.f32 %v173, 1.0
  %v176 = vmul.f32 %v160, %v174
  %v177 = vmul.f32 %v161, %v175
  %178 = vst [vmem:[%s5] sm:$0xff] %v176
  %179 = vst [vmem:[%s5 + $0x8] sm:$0xff] %v177
  // Predicated region
  $region22: #{gpt_forward.14} parent=0 // pred_check
    _
  $region23: #{gpt_forward.14} parent=0 // pred_check_branch
    %181 = sbr.rel (0) target = $region25
  $region24: #{gpt_forward.14} parent=0 // pred_region
    _
  $region25: #{gpt_forward.14} parent=0 // pred_fallthru
    _
  // Predicated region
  $region26: #{gpt_forward.14} parent=0 // pred_check
    _
  $region27: #{gpt_forward.14} parent=0 // pred_check_branch
    %183 = sbr.rel (0) target = $region29
  $region28: #{gpt_forward.14} parent=0 // pred_region
    _
  $region29: #{gpt_forward.14} parent=0 // pred_fallthru
    _

// kernel: gpt_forward.12
$region0: #{gpt_forward.12}
  #allocation0 [shape = 'u32[]', space=smem, size = 0x4, offset = 0x4, fixed_abs, tag = 'smem constant byte address 0x4 - core index']
  #allocation1 [shape = 'u32[144,128]{1,0:T(1,128)}', space=vmem, size = 0x12000, scoped, tag = 'internal scratch']
  %s0 = inlined_call_operand.vmem [shape: f32[8,8,8], index: 0, kind: input, shape index: {}]
  %s1 = inlined_call_operand.vmem [shape: f32[8,8,8], index: 1, kind: input, shape index: {}]
  %s2 = inlined_call_operand.vmem [shape: f32[8,8,8], index: 2, kind: input, shape index: {}]
  %s3 = inlined_call_operand.vmem [shape: f32[8,8,8], index: 3, kind: output, shape index: {}]
  %s4 = sld [smem:[#allocation0]]
  $region45: #{gpt_forward.12} parent=0
    _
  %s6 = ssub.s32 1, %s4
  %s7 = scalar_select 0, %s6, %s4
  loop: start=0, step=1, limit=4
  $region2: #{gpt_forward.12} parent=0 // loop_pre_header
    _
  $region3: #{gpt_forward.12} parent=0 // loop_header
    %s9 = sphi 0, %s13
    %p10 = scmp.ge.s32.totalorder %s9, 4
    %s19 = sphi 0, %s21
    %s22 = sphi 0, %s19
    %s23 = sphi 0, %s22
    %s39 = sphi 0, %s23
    %s45 = sphi 0, %s47
    %s48 = sphi 0, %s45
    %s49 = sphi 0, %s48
    %s65 = sphi 0, %s49
    %s71 = sphi 0, %s73
    %s74 = sphi 0, %s71
    %s75 = sphi 0, %s74
    %s91 = sphi 0, %s75
    %s97 = sphi 0, %s99
    %s100 = sphi 0, %s97
    %s101 = sphi 0, %s100
    %s117 = sphi 0, %s101
  $region4: #{gpt_forward.12} parent=0 // loop_header_branch
    %12 = sbr.rel (%p10) target = $region8
  $region5: #{gpt_forward.12} parent=0 // loop_body
    %s14 = ssub.s32 %s9, 1
    %s15 = ssub.s32 %s9, 2
    %s16 = sadd.s32 %s9, 1
    %s17 = ssub.s32 %s9, %s16
    %p18 = scmp.eq.s32.totalorder %s17, 0
    %s20 = sadd.s32 %s19, 1
    %s21 = scalar_select %p18, %s19, %s20
    %p24 = pneg %p18
    %p25 = scmp.eq.s32.totalorder %s9, 1
    %p26 = por %p24, %p25
    %p27 = scmp.ne.s32.totalorder %s19, %s22
    %p28 = scmp.eq.s32.totalorder %s9, 0
    %p29 = por %p27, %p28
    %p30 = scmp.ne.s32.totalorder %s19, %s22
    %p31 = scmp.eq.s32.totalorder %s14, 1
    %p32 = por %p30, %p31
    %p33 = scmp.ne.s32.totalorder %s22, %s23
    %p34 = scmp.eq.s32.totalorder %s14, 0
    %p35 = por %p33, %p34
    %p36 = scmp.ne.s32.totalorder %s22, %s23
    %p37 = scmp.eq.s32.totalorder %s15, 1
    %p38 = por %p36, %p37
    %p40 = scmp.ne.s32.totalorder %s23, %s39
    %p41 = scmp.eq.s32.totalorder %s15, 0
    %p42 = por %p40, %p41
    %s43 = ssub.s32 %s9, %s16
    %p44 = scmp.eq.s32.totalorder %s43, 0
    %s46 = sadd.s32 %s45, 1
    %s47 = scalar_select %p44, %s45, %s46
    %p50 = pneg %p44
    %p51 = scmp.eq.s32.totalorder %s9, 1
    %p52 = por %p50, %p51
    %p53 = scmp.ne.s32.totalorder %s45, %s48
    %p54 = scmp.eq.s32.totalorder %s9, 0
    %p55 = por %p53, %p54
    %p56 = scmp.ne.s32.totalorder %s45, %s48
    %p57 = scmp.eq.s32.totalorder %s14, 1
    %p58 = por %p56, %p57
    %p59 = scmp.ne.s32.totalorder %s48, %s49
    %p60 = scmp.eq.s32.totalorder %s14, 0
    %p61 = por %p59, %p60
    %p62 = scmp.ne.s32.totalorder %s48, %s49
    %p63 = scmp.eq.s32.totalorder %s15, 1
    %p64 = por %p62, %p63
    %p66 = scmp.ne.s32.totalorder %s49, %s65
    %p67 = scmp.eq.s32.totalorder %s15, 0
    %p68 = por %p66, %p67
    %s69 = ssub.s32 %s9, %s16
    %p70 = scmp.eq.s32.totalorder %s69, 0
    %s72 = sadd.s32 %s71, 1
    %s73 = scalar_select %p70, %s71, %s72
    %p76 = pneg %p70
    %p77 = scmp.eq.s32.totalorder %s9, 1
    %p78 = por %p76, %p77
    %p79 = scmp.ne.s32.totalorder %s71, %s74
    %p80 = scmp.eq.s32.totalorder %s9, 0
    %p81 = por %p79, %p80
    %p82 = scmp.ne.s32.totalorder %s71, %s74
    %p83 = scmp.eq.s32.totalorder %s14, 1
    %p84 = por %p82, %p83
    %p85 = scmp.ne.s32.totalorder %s74, %s75
    %p86 = scmp.eq.s32.totalorder %s14, 0
    %p87 = por %p85, %p86
    %p88 = scmp.ne.s32.totalorder %s74, %s75
    %p89 = scmp.eq.s32.totalorder %s15, 1
    %p90 = por %p88, %p89
    %p92 = scmp.ne.s32.totalorder %s75, %s91
    %p93 = scmp.eq.s32.totalorder %s15, 0
    %p94 = por %p92, %p93
    %s95 = ssub.s32 %s9, %s16
    %p96 = scmp.eq.s32.totalorder %s95, 0
    %s98 = sadd.s32 %s97, 1
    %s99 = scalar_select %p96, %s97, %s98
    %p102 = pneg %p96
    %p103 = scmp.eq.s32.totalorder %s9, 1
    %p104 = por %p102, %p103
    %p105 = scmp.ne.s32.totalorder %s97, %s100
    %p106 = scmp.eq.s32.totalorder %s9, 0
    %p107 = por %p105, %p106
    %p108 = scmp.ne.s32.totalorder %s97, %s100
    %p109 = scmp.eq.s32.totalorder %s14, 1
    %p110 = por %p108, %p109
    %p111 = scmp.ne.s32.totalorder %s100, %s101
    %p112 = scmp.eq.s32.totalorder %s14, 0
    %p113 = por %p111, %p112
    %p114 = scmp.ne.s32.totalorder %s100, %s101
    %p115 = scmp.eq.s32.totalorder %s15, 1
    %p116 = por %p114, %p115
    %p118 = scmp.ne.s32.totalorder %s101, %s117
    %p119 = scmp.eq.s32.totalorder %s15, 0
    %p120 = por %p118, %p119
    %p121 = scmp.le.s32.totalorder 1, %s9
    %p122 = scmp.lt.s32.totalorder %s9, 3
    %p123 = pnand %p121, %p122
    %p124 = pneg %p123
    // Predicated region
    $region9: #{gpt_forward.12} parent=5 // pred_check
      _
    $region10: #{gpt_forward.12} parent=5 // pred_check_branch
      %126 = sbr.rel (%p123) target = $region12
    $region11: #{gpt_forward.12} parent=5 // pred_region
      %s127 = ssub.s32 %s9, 1
    $region12: #{gpt_forward.12} parent=5 // pred_fallthru
      _
    %p128 = scmp.lt.s32.totalorder %s9, 2
    // Predicated region
    $region13: #{gpt_forward.12} parent=5 // pred_check
      %p129 = pneg %p128
    $region14: #{gpt_forward.12} parent=5 // pred_check_branch
      %131 = sbr.rel (%p129) target = $region16
    $region15: #{gpt_forward.12} parent=5 // pred_region
      // Predicated region
      $region17: #{gpt_forward.12} parent=15 // pred_check
        %p132 = pneg %p29
      $region18: #{gpt_forward.12} parent=15 // pred_check_branch
        %134 = sbr.rel (%p132) target = $region20
      $region19: #{gpt_forward.12} parent=15 // pred_region
        %s135 = smul.u32 4, %s9
        %p136 = scmp.lt.s32.totalorder %s135, 7
        %s137 = scalar_select %p136, %s135, 7
        %s138 = smul.addr %s137, 8
        %s139 = scalar_lea.vmem %s0, %s138
        %s140 = smul.u32 4, %s9
      $region20: #{gpt_forward.12} parent=15 // pred_fallthru
        _
      // Predicated region
      $region21: #{gpt_forward.12} parent=15 // pred_check
        %p141 = pneg %p55
      $region22: #{gpt_forward.12} parent=15 // pred_check_branch
        %143 = sbr.rel (%p141) target = $region24
      $region23: #{gpt_forward.12} parent=15 // pred_region
        %s144 = smul.u32 4, %s9
        %p145 = scmp.lt.s32.totalorder %s144, 7
        %s146 = scalar_select %p145, %s144, 7
        %s147 = smul.addr %s146, 8
        %s148 = scalar_lea.vmem %s1, %s147
        %s149 = smul.u32 4, %s9
      $region24: #{gpt_forward.12} parent=15 // pred_fallthru
        _
      // Predicated region
      $region25: #{gpt_forward.12} parent=15 // pred_check
        %p150 = pneg %p81
      $region26: #{gpt_forward.12} parent=15 // pred_check_branch
        %152 = sbr.rel (%p150) target = $region28
      $region27: #{gpt_forward.12} parent=15 // pred_region
        %s153 = smul.u32 4, %s9
        %p154 = scmp.lt.s32.totalorder %s153, 7
        %s155 = scalar_select %p154, %s153, 7
        %s156 = smul.addr %s155, 8
        %s157 = scalar_lea.vmem %s2, %s156
        %s158 = smul.u32 4, %s9
      $region28: #{gpt_forward.12} parent=15 // pred_fallthru
        _
    $region16: #{gpt_forward.12} parent=5 // pred_fallthru
      _
    %p159 = scmp.le.s32.totalorder 1, %s9
    %p160 = scmp.lt.s32.totalorder %s9, 3
    %p161 = pnand %p159, %p160
    %p162 = pneg %p161
    // Predicated region
    $region29: #{gpt_forward.12} parent=5 // pred_check
      _
    $region30: #{gpt_forward.12} parent=5 // pred_check_branch
      %164 = sbr.rel (%p161) target = $region32
    $region31: #{gpt_forward.12} parent=5 // pred_region
      %s165 = ssub.s32 %s9, 1
      %s166 = smul.u32 4, %s14
      %p167 = scmp.lt.s32.totalorder %s166, 7
      %s168 = scalar_select %p167, %s166, 7
      %s169 = smul.addr %s168, 8
      %s170 = scalar_lea.vmem %s0, %s169
      %p171 = pneg %p35
      %p172 = pneg %p32
      %s173 = smul.u32 4, %s14
      %p174 = scmp.lt.s32.totalorder %s173, 7
      %s175 = scalar_select %p174, %s173, 7
      %s176 = smul.addr %s175, 8
      %s177 = scalar_lea.vmem %s1, %s176
      %p178 = pneg %p61
      %p179 = pneg %p58
      %s180 = smul.u32 4, %s14
      %p181 = scmp.lt.s32.totalorder %s180, 7
      %s182 = scalar_select %p181, %s180, 7
      %s183 = smul.addr %s182, 8
      %s184 = scalar_lea.vmem %s2, %s183
      %p185 = pneg %p87
      %p186 = pneg %p84
      %p187 = pneg %p113
      %p188 = pneg %p110
      %s189 = smul.u32 4, %s14
      %p190 = scmp.lt.s32.totalorder %s189, 7
      %s191 = scalar_select %p190, %s189, 7
      %s192 = smul.addr %s191, 8
      %s193 = scalar_lea.vmem %s3, %s192
      %s194 = smul.u32 4, %s14
      %p195 = scmp.lt.s32.totalorder %s194, 7
      %s196 = scalar_select %p195, %s194, 7
      %s197 = smul.addr %s196, 8
      %s198 = scalar_lea.vmem %s0, %s197
      %s199 = smul.u32 4, %s14
      %s200 = smul.u32 4, %s14
      %p201 = scmp.lt.s32.totalorder %s200, 7
      %s202 = scalar_select %p201, %s200, 7
      %s203 = smul.addr %s202, 8
      %s204 = scalar_lea.vmem %s1, %s203
      %s205 = smul.u32 4, %s14
      %s206 = smul.u32 4, %s14
      %p207 = scmp.lt.s32.totalorder %s206, 7
      %s208 = scalar_select %p207, %s206, 7
      %s209 = smul.addr %s208, 8
      %s210 = scalar_lea.vmem %s2, %s209
      %s211 = smul.u32 4, %s14
      %s212 = smul.u32 4, %s14
      %p213 = scmp.lt.s32.totalorder %s212, 7
      %s214 = scalar_select %p213, %s212, 7
      %s215 = smul.addr %s214, 8
      %s216 = scalar_lea.vmem %s3, %s215
      %s217 = smul.u32 4, %s14
      %v218 = vld [vmem:[%s198] sm:$0xff]
      %v219 = vld [vmem:[%s198 + $0x8] sm:$0xff]
      %v220 = vld [vmem:[%s198 + $0x10] sm:$0xff]
      %v221 = vld [vmem:[%s198 + $0x18] sm:$0xff]
      %v222 = vld [vmem:[%s204] sm:$0xff]
      %v223 = vld [vmem:[%s204 + $0x8] sm:$0xff]
      %v224 = vld [vmem:[%s204 + $0x10] sm:$0xff]
      %v225 = vld [vmem:[%s204 + $0x18] sm:$0xff]
      %v226 = vld [vmem:[%s210] sm:$0xff]
      %v227 = vld [vmem:[%s210 + $0x8] sm:$0xff]
      %v228 = vld [vmem:[%s210 + $0x10] sm:$0xff]
      %v229 = vld [vmem:[%s210 + $0x18] sm:$0xff]
      %vm230 = vcmask 64512
      %v232 = vsel %vm230, %v218, 0
      %v235 = vsel %vm230, %v222, 0
      %237 = vmatprep.subr.mxu0 0.0
      %238 = vmatpush1.xpose.msra.mxu0 %v235
      %239 = vmatprep.subr.mxu0 0.0
      %240 = vmatpush1.xpose.msra.mxu0 0.0
      %241 = vmatprep.subr.mxu0 0.0
      %242 = vmatpush1.xpose.msra.mxu0 0.0
      %243 = vmatprep.subr.mxu0 0.0
      %244 = vmatpush1.xpose.msra.mxu0 0.0
      %245 = vmatprep.subr.mxu0 0.0
      %246 = vmatpush1.xpose.msra.mxu0 0.0
      %247 = vmatprep.subr.mxu0 0.0
      %248 = vmatpush1.xpose.msra.mxu0 0.0
      %249 = vmatprep.subr.mxu0 0.0
      %250 = vmatpush1.xpose.msra.mxu0 0.0
      %251 = vmatprep.subr.mxu0 0.0
      %252 = vmatpush1.xpose.msra.mxu0 0.0
      %253 = vmatprep.subr.mxu0 0.0
      %254 = vmatpush1.xpose.msra.mxu0 0.0
      %255 = vmatprep.subr.mxu0 0.0
      %256 = vmatpush1.xpose.msra.mxu0 0.0
      %257 = vmatprep.subr.mxu0 0.0
      %258 = vmatpush1.xpose.msra.mxu0 0.0
      %259 = vmatprep.subr.mxu0 0.0
      %260 = vmatpush1.xpose.msra.mxu0 0.0
      %261 = vmatprep.subr.mxu0 0.0
      %262 = vmatpush1.xpose.msra.mxu0 0.0
      %263 = vmatprep.subr.mxu0 0.0
      %264 = vmatpush1.xpose.msra.mxu0 0.0
      %265 = vmatprep.subr.mxu0 0.0
      %266 = vmatpush1.xpose.msra.mxu0 0.0
      %267 = vmatprep.subr.mxu0 0.0
      %268 = vmatpush1.xpose.msra.mxu0 0.0
      %269 = vmatprep.subr.mxu0 0.0
      %270 = vmatpush1.xpose.msra.mxu0 0.0
      %271 = vmatprep.subr.mxu0 0.0
      %272 = vmatpush1.xpose.msra.mxu0 0.0
      %273 = vmatprep.subr.mxu0 0.0
      %274 = vmatpush1.xpose.msra.mxu0 0.0
      %275 = vmatprep.subr.mxu0 0.0
      %276 = vmatpush1.xpose.msra.mxu0 0.0
      %277 = vmatprep.subr.mxu0 0.0
      %278 = vmatpush1.xpose.msra.mxu0 0.0
      %279 = vmatprep.subr.mxu0 0.0
      %280 = vmatpush1.xpose.msra.mxu0 0.0
      %281 = vmatprep.subr.mxu0 0.0
      %282 = vmatpush1.xpose.msra.mxu0 0.0
      %283 = vmatprep.subr.mxu0 0.0
      %284 = vmatpush1.xpose.msra.mxu0 0.0
      %285 = vmatprep.subr.mxu0 0.0
      %286 = vmatpush1.xpose.msra.mxu0 0.0
      %287 = vmatprep.subr.mxu0 0.0
      %288 = vmatpush1.xpose.msra.mxu0 0.0
      %289 = vmatprep.subr.mxu0 0.0
      %290 = vmatpush1.xpose.msra.mxu0 0.0
      %291 = vmatprep.subr.mxu0 0.0
      %292 = vmatpush1.xpose.msra.mxu0 0.0
      %293 = vmatprep.subr.mxu0 0.0
      %294 = vmatpush1.xpose.msra.mxu0 0.0
      %295 = vmatprep.subr.mxu0 0.0
      %296 = vmatpush1.xpose.msra.mxu0 0.0
      %297 = vmatprep.subr.mxu0 0.0
      %298 = vmatpush1.xpose.msra.mxu0 0.0
      %299 = vmatprep.subr.mxu0 0.0
      %300 = vmatpush1.xpose.msra.mxu0 0.0
      %301 = vmatprep.mubr.f32.mxu0 0.0
      %302 = vmatmul.mubr.f32.gmra.mrb[0].mxu0 %v232
      %v303 = vpop.f32.mrb[0].mxu0
      %v304 = vadd.f32 0.0, %v303
      %v305 = vpop.f32.mrb[0].mxu0
      %306 = vdwg.mxu0
      %v308 = vsel %vm230, %v219, 0
      %v311 = vsel %vm230, %v223, 0
      %313 = vmatprep.subr.mxu0 0.0
      %314 = vmatpush1.xpose.msra.mxu0 %v311
      %315 = vmatprep.subr.mxu0 0.0
      %316 = vmatpush1.xpose.msra.mxu0 0.0
      %317 = vmatprep.subr.mxu0 0.0
      %318 = vmatpush1.xpose.msra.mxu0 0.0
      %319 = vmatprep.subr.mxu0 0.0
      %320 = vmatpush1.xpose.msra.mxu0 0.0
      %321 = vmatprep.subr.mxu0 0.0
      %322 = vmatpush1.xpose.msra.mxu0 0.0
      %323 = vmatprep.subr.mxu0 0.0
      %324 = vmatpush1.xpose.msra.mxu0 0.0
      %325 = vmatprep.subr.mxu0 0.0
      %326 = vmatpush1.xpose.msra.mxu0 0.0
      %327 = vmatprep.subr.mxu0 0.0
      %328 = vmatpush1.xpose.msra.mxu0 0.0
      %329 = vmatprep.subr.mxu0 0.0
      %330 = vmatpush1.xpose.msra.mxu0 0.0
      %331 = vmatprep.subr.mxu0 0.0
      %332 = vmatpush1.xpose.msra.mxu0 0.0
      %333 = vmatprep.subr.mxu0 0.0
      %334 = vmatpush1.xpose.msra.mxu0 0.0
      %335 = vmatprep.subr.mxu0 0.0
      %336 = vmatpush1.xpose.msra.mxu0 0.0
      %337 = vmatprep.subr.mxu0 0.0
      %338 = vmatpush1.xpose.msra.mxu0 0.0
      %339 = vmatprep.subr.mxu0 0.0
      %340 = vmatpush1.xpose.msra.mxu0 0.0
      %341 = vmatprep.subr.mxu0 0.0
      %342 = vmatpush1.xpose.msra.mxu0 0.0
      %343 = vmatprep.subr.mxu0 0.0
      %344 = vmatpush1.xpose.msra.mxu0 0.0
      %345 = vmatprep.subr.mxu0 0.0
      %346 = vmatpush1.xpose.msra.mxu0 0.0
      %347 = vmatprep.subr.mxu0 0.0
      %348 = vmatpush1.xpose.msra.mxu0 0.0
      %349 = vmatprep.subr.mxu0 0.0
      %350 = vmatpush1.xpose.msra.mxu0 0.0
      %351 = vmatprep.subr.mxu0 0.0
      %352 = vmatpush1.xpose.msra.mxu0 0.0
      %353 = vmatprep.subr.mxu0 0.0
      %354 = vmatpush1.xpose.msra.mxu0 0.0
      %355 = vmatprep.subr.mxu0 0.0
      %356 = vmatpush1.xpose.msra.mxu0 0.0
      %357 = vmatprep.subr.mxu0 0.0
      %358 = vmatpush1.xpose.msra.mxu0 0.0
      %359 = vmatprep.subr.mxu0 0.0
      %360 = vmatpush1.xpose.msra.mxu0 0.0
      %361 = vmatprep.subr.mxu0 0.0
      %362 = vmatpush1.xpose.msra.mxu0 0.0
      %363 = vmatprep.subr.mxu0 0.0
      %364 = vmatpush1.xpose.msra.mxu0 0.0
      %365 = vmatprep.subr.mxu0 0.0
      %366 = vmatpush1.xpose.msra.mxu0 0.0
      %367 = vmatprep.subr.mxu0 0.0
      %368 = vmatpush1.xpose.msra.mxu0 0.0
      %369 = vmatprep.subr.mxu0 0.0
      %370 = vmatpush1.xpose.msra.mxu0 0.0
      %371 = vmatprep.subr.mxu0 0.0
      %372 = vmatpush1.xpose.msra.mxu0 0.0
      %373 = vmatprep.subr.mxu0 0.0
      %374 = vmatpush1.xpose.msra.mxu0 0.0
      %375 = vmatprep.subr.mxu0 0.0
      %376 = vmatpush1.xpose.msra.mxu0 0.0
      %377 = vmatprep.mubr.f32.mxu0 0.0
      %378 = vmatmul.mubr.f32.gmra.mrb[0].mxu0 %v308
      %v379 = vpop.f32.mrb[0].mxu0
      %v380 = vadd.f32 0.0, %v379
      %v381 = vpop.f32.mrb[0].mxu0
      %382 = vdwg.mxu0
      %v384 = vsel %vm230, %v220, 0
      %v387 = vsel %vm230, %v224, 0
      %389 = vmatprep.subr.mxu0 0.0
      %390 = vmatpush1.xpose.msra.mxu0 %v387
      %391 = vmatprep.subr.mxu0 0.0
      %392 = vmatpush1.xpose.msra.mxu0 0.0
      %393 = vmatprep.subr.mxu0 0.0
      %394 = vmatpush1.xpose.msra.mxu0 0.0
      %395 = vmatprep.subr.mxu0 0.0
      %396 = vmatpush1.xpose.msra.mxu0 0.0
      %397 = vmatprep.subr.mxu0 0.0
      %398 = vmatpush1.xpose.msra.mxu0 0.0
      %399 = vmatprep.subr.mxu0 0.0
      %400 = vmatpush1.xpose.msra.mxu0 0.0
      %401 = vmatprep.subr.mxu0 0.0
      %402 = vmatpush1.xpose.msra.mxu0 0.0
      %403 = vmatprep.subr.mxu0 0.0
      %404 = vmatpush1.xpose.msra.mxu0 0.0
      %405 = vmatprep.subr.mxu0 0.0
      %406 = vmatpush1.xpose.msra.mxu0 0.0
      %407 = vmatprep.subr.mxu0 0.0
      %408 = vmatpush1.xpose.msra.mxu0 0.0
      %409 = vmatprep.subr.mxu0 0.0
      %410 = vmatpush1.xpose.msra.mxu0 0.0
      %411 = vmatprep.subr.mxu0 0.0
      %412 = vmatpush1.xpose.msra.mxu0 0.0
      %413 = vmatprep.subr.mxu0 0.0
      %414 = vmatpush1.xpose.msra.mxu0 0.0
      %415 = vmatprep.subr.mxu0 0.0
      %416 = vmatpush1.xpose.msra.mxu0 0.0
      %417 = vmatprep.subr.mxu0 0.0
      %418 = vmatpush1.xpose.msra.mxu0 0.0
      %419 = vmatprep.subr.mxu0 0.0
      %420 = vmatpush1.xpose.msra.mxu0 0.0
      %421 = vmatprep.subr.mxu0 0.0
      %422 = vmatpush1.xpose.msra.mxu0 0.0
      %423 = vmatprep.subr.mxu0 0.0
      %424 = vmatpush1.xpose.msra.mxu0 0.0
      %425 = vmatprep.subr.mxu0 0.0
      %426 = vmatpush1.xpose.msra.mxu0 0.0
      %427 = vmatprep.subr.mxu0 0.0
      %428 = vmatpush1.xpose.msra.mxu0 0.0
      %429 = vmatprep.subr.mxu0 0.0
      %430 = vmatpush1.xpose.msra.mxu0 0.0
      %431 = vmatprep.subr.mxu0 0.0
      %432 = vmatpush1.xpose.msra.mxu0 0.0
      %433 = vmatprep.subr.mxu0 0.0
      %434 = vmatpush1.xpose.msra.mxu0 0.0
      %435 = vmatprep.subr.mxu0 0.0
      %436 = vmatpush1.xpose.msra.mxu0 0.0
      %437 = vmatprep.subr.mxu0 0.0
      %438 = vmatpush1.xpose.msra.mxu0 0.0
      %439 = vmatprep.subr.mxu0 0.0
      %440 = vmatpush1.xpose.msra.mxu0 0.0
      %441 = vmatprep.subr.mxu0 0.0
      %442 = vmatpush1.xpose.msra.mxu0 0.0
      %443 = vmatprep.subr.mxu0 0.0
      %444 = vmatpush1.xpose.msra.mxu0 0.0
      %445 = vmatprep.subr.mxu0 0.0
      %446 = vmatpush1.xpose.msra.mxu0 0.0
      %447 = vmatprep.subr.mxu0 0.0
      %448 = vmatpush1.xpose.msra.mxu0 0.0
      %449 = vmatprep.subr.mxu0 0.0
      %450 = vmatpush1.xpose.msra.mxu0 0.0
      %451 = vmatprep.subr.mxu0 0.0
      %452 = vmatpush1.xpose.msra.mxu0 0.0
      %453 = vmatprep.mubr.f32.mxu0 0.0
      %454 = vmatmul.mubr.f32.gmra.mrb[0].mxu0 %v384
      %v455 = vpop.f32.mrb[0].mxu0
      %v456 = vadd.f32 0.0, %v455
      %v457 = vpop.f32.mrb[0].mxu0
      %458 = vdwg.mxu0
      %v460 = vsel %vm230, %v221, 0
      %v463 = vsel %vm230, %v225, 0
      %465 = vmatprep.subr.mxu0 0.0
      %466 = vmatpush1.xpose.msra.mxu0 %v463
      %467 = vmatprep.subr.mxu0 0.0
      %468 = vmatpush1.xpose.msra.mxu0 0.0
      %469 = vmatprep.subr.mxu0 0.0
      %470 = vmatpush1.xpose.msra.mxu0 0.0
      %471 = vmatprep.subr.mxu0 0.0
      %472 = vmatpush1.xpose.msra.mxu0 0.0
      %473 = vmatprep.subr.mxu0 0.0
      %474 = vmatpush1.xpose.msra.mxu0 0.0
      %475 = vmatprep.subr.mxu0 0.0
      %476 = vmatpush1.xpose.msra.mxu0 0.0
      %477 = vmatprep.subr.mxu0 0.0
      %478 = vmatpush1.xpose.msra.mxu0 0.0
      %479 = vmatprep.subr.mxu0 0.0
      %480 = vmatpush1.xpose.msra.mxu0 0.0
      %481 = vmatprep.subr.mxu0 0.0
      %482 = vmatpush1.xpose.msra.mxu0 0.0
      %483 = vmatprep.subr.mxu0 0.0
      %484 = vmatpush1.xpose.msra.mxu0 0.0
      %485 = vmatprep.subr.mxu0 0.0
      %486 = vmatpush1.xpose.msra.mxu0 0.0
      %487 = vmatprep.subr.mxu0 0.0
      %488 = vmatpush1.xpose.msra.mxu0 0.0
      %489 = vmatprep.subr.mxu0 0.0
      %490 = vmatpush1.xpose.msra.mxu0 0.0
      %491 = vmatprep.subr.mxu0 0.0
      %492 = vmatpush1.xpose.msra.mxu0 0.0
      %493 = vmatprep.subr.mxu0 0.0
      %494 = vmatpush1.xpose.msra.mxu0 0.0
      %495 = vmatprep.subr.mxu0 0.0
      %496 = vmatpush1.xpose.msra.mxu0 0.0
      %497 = vmatprep.subr.mxu0 0.0
      %498 = vmatpush1.xpose.msra.mxu0 0.0
      %499 = vmatprep.subr.mxu0 0.0
      %500 = vmatpush1.xpose.msra.mxu0 0.0
      %501 = vmatprep.subr.mxu0 0.0
      %502 = vmatpush1.xpose.msra.mxu0 0.0
      %503 = vmatprep.subr.mxu0 0.0
      %504 = vmatpush1.xpose.msra.mxu0 0.0
      %505 = vmatprep.subr.mxu0 0.0
      %506 = vmatpush1.xpose.msra.mxu0 0.0
      %507 = vmatprep.subr.mxu0 0.0
      %508 = vmatpush1.xpose.msra.mxu0 0.0
      %509 = vmatprep.subr.mxu0 0.0
      %510 = vmatpush1.xpose.msra.mxu0 0.0
      %511 = vmatprep.subr.mxu0 0.0
      %512 = vmatpush1.xpose.msra.mxu0 0.0
      %513 = vmatprep.subr.mxu0 0.0
      %514 = vmatpush1.xpose.msra.mxu0 0.0
      %515 = vmatprep.subr.mxu0 0.0
      %516 = vmatpush1.xpose.msra.mxu0 0.0
      %517 = vmatprep.subr.mxu0 0.0
      %518 = vmatpush1.xpose.msra.mxu0 0.0
      %519 = vmatprep.subr.mxu0 0.0
      %520 = vmatpush1.xpose.msra.mxu0 0.0
      %521 = vmatprep.subr.mxu0 0.0
      %522 = vmatpush1.xpose.msra.mxu0 0.0
      %523 = vmatprep.subr.mxu0 0.0
      %524 = vmatpush1.xpose.msra.mxu0 0.0
      %525 = vmatprep.subr.mxu0 0.0
      %526 = vmatpush1.xpose.msra.mxu0 0.0
      %527 = vmatprep.subr.mxu0 0.0
      %528 = vmatpush1.xpose.msra.mxu0 0.0
      %529 = vmatprep.mubr.f32.mxu0 0.0
      %530 = vmatmul.mubr.f32.gmra.mrb[0].mxu0 %v460
      %v531 = vpop.f32.mrb[0].mxu0
      %v532 = vadd.f32 0.0, %v531
      %v533 = vpop.f32.mrb[0].mxu0
      %534 = vdwg.mxu0
      %v535 = vmul.f32 %v304, 0.35355338
      %v536 = vmul.f32 %v380, 0.35355338
      %v537 = vmul.f32 %v456, 0.35355338
      %v538 = vmul.f32 %v532, 0.35355338
      %v539 = vlaneseq
      %v540 = vshrl.u32 %v539, 7
      %v541 = vlaneseq
      %v542 = vand.u32 %v541, 127
      %vm543 = vcmp.ge.s32.totalorder %v540, %v542
      %v544 = vsel %vm543, 1, 0
      %vm545 = vcmp.eq.s32.totalorder %v544, 1
      %v546 = vsel %vm545, %v535, -inf
      %v547 = vsel %vm545, %v536, -inf
      %v548 = vsel %vm545, %v537, -inf
      %v549 = vsel %vm545, %v538, -inf
      %v550 = vsel %vm230, %v546, -inf
      %551 = vmax.xlane.f32.xlu0 %v550
      %v552 = vpop.xlane.xlu0 %551
      %v553 = vsel %vm230, %v547, -inf
      %554 = vmax.xlane.f32.xlu0 %v553
      %v555 = vpop.xlane.xlu0 %554
      %v556 = vsel %vm230, %v548, -inf
      %557 = vmax.xlane.f32.xlu0 %v556
      %v558 = vpop.xlane.xlu0 %557
      %v559 = vsel %vm230, %v549, -inf
      %560 = vmax.xlane.f32.xlu0 %v559
      %v561 = vpop.xlane.xlu0 %560
      %v562 = vsub.f32 %v546, %v552
      %v563 = vsub.f32 %v547, %v555
      %v564 = vsub.f32 %v548, %v558
      %v565 = vsub.f32 %v549, %v561
      %v566 = vmul.f32 %v562, 1.442695
      %v567 = vpow.pop %v566
      %v568 = vmul.f32 %v563, 1.442695
      %v569 = vpow.pop %v568
      %v570 = vmul.f32 %v564, 1.442695
      %v571 = vpow.pop %v570
      %v572 = vmul.f32 %v565, 1.442695
      %v573 = vpow.pop %v572
      %v574 = vsel %vm230, %v567, 0.0
      %575 = vadd.xlane.f32.xlu0 %v574
      %v576 = vpop.xlane.xlu0 %575
      %v577 = vsel %vm230, %v569, 0.0
      %578 = vadd.xlane.f32.xlu0 %v577
      %v579 = vpop.xlane.xlu0 %578
      %v580 = vsel %vm230, %v571, 0.0
      %581 = vadd.xlane.f32.xlu0 %v580
      %v582 = vpop.xlane.xlu0 %581
      %v583 = vsel %vm230, %v573, 0.0
      %584 = vadd.xlane.f32.xlu0 %v583
      %v585 = vpop.xlane.xlu0 %584
      %v586 = vrcp.pop %v576
      %v587 = vmul.f32 %v567, %v586
      %v588 = vrcp.pop %v579
      %v589 = vmul.f32 %v569, %v588
      %v590 = vrcp.pop %v582
      %v591 = vmul.f32 %v571, %v590
      %v592 = vrcp.pop %v585
      %v593 = vmul.f32 %v573, %v592
      %v595 = vsel %vm230, %v587, 0
      %597 = vmatprep.subr.mxu0 0.0
      %598 = vmatpush1.msra.mxu0 %v226
      %599 = vmatprep.subr.mxu0 0.0
      %600 = vmatpush1.msra.mxu0 0.0
      %601 = vmatprep.subr.mxu0 0.0
      %602 = vmatpush1.msra.mxu0 0.0
      %603 = vmatprep.subr.mxu0 0.0
      %604 = vmatpush1.msra.mxu0 0.0
      %605 = vmatprep.subr.mxu0 0.0
      %606 = vmatpush1.msra.mxu0 0.0
      %607 = vmatprep.subr.mxu0 0.0
      %608 = vmatpush1.msra.mxu0 0.0
      %609 = vmatprep.subr.mxu0 0.0
      %610 = vmatpush1.msra.mxu0 0.0
      %611 = vmatprep.subr.mxu0 0.0
      %612 = vmatpush1.msra.mxu0 0.0
      %613 = vmatprep.subr.mxu0 0.0
      %614 = vmatpush1.msra.mxu0 0.0
      %615 = vmatprep.subr.mxu0 0.0
      %616 = vmatpush1.msra.mxu0 0.0
      %617 = vmatprep.subr.mxu0 0.0
      %618 = vmatpush1.msra.mxu0 0.0
      %619 = vmatprep.subr.mxu0 0.0
      %620 = vmatpush1.msra.mxu0 0.0
      %621 = vmatprep.subr.mxu0 0.0
      %622 = vmatpush1.msra.mxu0 0.0
      %623 = vmatprep.subr.mxu0 0.0
      %624 = vmatpush1.msra.mxu0 0.0
      %625 = vmatprep.subr.mxu0 0.0
      %626 = vmatpush1.msra.mxu0 0.0
      %627 = vmatprep.subr.mxu0 0.0
      %628 = vmatpush1.msra.mxu0 0.0
      %629 = vmatprep.subr.mxu0 0.0
      %630 = vmatpush1.msra.mxu0 0.0
      %631 = vmatprep.subr.mxu0 0.0
      %632 = vmatpush1.msra.mxu0 0.0
      %633 = vmatprep.subr.mxu0 0.0
      %634 = vmatpush1.msra.mxu0 0.0
      %635 = vmatprep.subr.mxu0 0.0
      %636 = vmatpush1.msra.mxu0 0.0
      %637 = vmatprep.subr.mxu0 0.0
      %638 = vmatpush1.msra.mxu0 0.0
      %639 = vmatprep.subr.mxu0 0.0
      %640 = vmatpush1.msra.mxu0 0.0
      %641 = vmatprep.subr.mxu0 0.0
      %642 = vmatpush1.msra.mxu0 0.0
      %643 = vmatprep.subr.mxu0 0.0
      %644 = vmatpush1.msra.mxu0 0.0
      %645 = vmatprep.subr.mxu0 0.0
      %646 = vmatpush1.msra.mxu0 0.0
      %647 = vmatprep.subr.mxu0 0.0
      %648 = vmatpush1.msra.mxu0 0.0
      %649 = vmatprep.subr.mxu0 0.0
      %650 = vmatpush1.msra.mxu0 0.0
      %651 = vmatprep.subr.mxu0 0.0
      %652 = vmatpush1.msra.mxu0 0.0
      %653 = vmatprep.subr.mxu0 0.0
      %654 = vmatpush1.msra.mxu0 0.0
      %655 = vmatprep.subr.mxu0 0.0
      %656 = vmatpush1.msra.mxu0 0.0
      %657 = vmatprep.subr.mxu0 0.0
      %658 = vmatpush1.msra.mxu0 0.0
      %659 = vmatprep.subr.mxu0 0.0
      %660 = vmatpush1.msra.mxu0 0.0
      %661 = vmatprep.mubr.f32.mxu0 0.0
      %662 = vmatmul.mubr.f32.gmra.mrb[0].mxu0 %v595
      %v663 = vpop.f32.mrb[0].mxu0
      %v664 = vadd.f32 0.0, %v663
      %v665 = vpop.f32.mrb[0].mxu0
      %666 = vdwg.mxu0
      %v668 = vsel %vm230, %v589, 0
      %670 = vmatprep.subr.mxu0 0.0
      %671 = vmatpush1.msra.mxu0 %v227
      %672 = vmatprep.subr.mxu0 0.0
      %673 = vmatpush1.msra.mxu0 0.0
      %674 = vmatprep.subr.mxu0 0.0
      %675 = vmatpush1.msra.mxu0 0.0
      %676 = vmatprep.subr.mxu0 0.0
      %677 = vmatpush1.msra.mxu0 0.0
      %678 = vmatprep.subr.mxu0 0.0
      %679 = vmatpush1.msra.mxu0 0.0
      %680 = vmatprep.subr.mxu0 0.0
      %681 = vmatpush1.msra.mxu0 0.0
      %682 = vmatprep.subr.mxu0 0.0
      %683 = vmatpush1.msra.mxu0 0.0
      %684 = vmatprep.subr.mxu0 0.0
      %685 = vmatpush1.msra.mxu0 0.0
      %686 = vmatprep.subr.mxu0 0.0
      %687 = vmatpush1.msra.mxu0 0.0
      %688 = vmatprep.subr.mxu0 0.0
      %689 = vmatpush1.msra.mxu0 0.0
      %690 = vmatprep.subr.mxu0 0.0
      %691 = vmatpush1.msra.mxu0 0.0
      %692 = vmatprep.subr.mxu0 0.0
      %693 = vmatpush1.msra.mxu0 0.0
      %694 = vmatprep.subr.mxu0 0.0
      %695 = vmatpush1.msra.mxu0 0.0
      %696 = vmatprep.subr.mxu0 0.0
      %697 = vmatpush1.msra.mxu0 0.0
      %698 = vmatprep.subr.mxu0 0.0
      %699 = vmatpush1.msra.mxu0 0.0
      %700 = vmatprep.subr.mxu0 0.0
      %701 = vmatpush1.msra.mxu0 0.0
      %702 = vmatprep.subr.mxu0 0.0
      %703 = vmatpush1.msra.mxu0 0.0
      %704 = vmatprep.subr.mxu0 0.0
      %705 = vmatpush1.msra.mxu0 0.0
      %706 = vmatprep.subr.mxu0 0.0
      %707 = vmatpush1.msra.mxu0 0.0
      %708 = vmatprep.subr.mxu0 0.0
      %709 = vmatpush1.msra.mxu0 0.0
      %710 = vmatprep.subr.mxu0 0.0
      %711 = vmatpush1.msra.mxu0 0.0
      %712 = vmatprep.subr.mxu0 0.0
      %713 = vmatpush1.msra.mxu0 0.0
      %714 = vmatprep.subr.mxu0 0.0
      %715 = vmatpush1.msra.mxu0 0.0
      %716 = vmatprep.subr.mxu0 0.0
      %717 = vmatpush1.msra.mxu0 0.0
      %718 = vmatprep.subr.mxu0 0.0
      %719 = vmatpush1.msra.mxu0 0.0
      %720 = vmatprep.subr.mxu0 0.0
      %721 = vmatpush1.msra.mxu0 0.0
      %722 = vmatprep.subr.mxu0 0.0
      %723 = vmatpush1.msra.mxu0 0.0
      %724 = vmatprep.subr.mxu0 0.0
      %725 = vmatpush1.msra.mxu0 0.0
      %726 = vmatprep.subr.mxu0 0.0
      %727 = vmatpush1.msra.mxu0 0.0
      %728 = vmatprep.subr.mxu0 0.0
      %729 = vmatpush1.msra.mxu0 0.0
      %730 = vmatprep.subr.mxu0 0.0
      %731 = vmatpush1.msra.mxu0 0.0
      %732 = vmatprep.subr.mxu0 0.0
      %733 = vmatpush1.msra.mxu0 0.0
      %734 = vmatprep.mubr.f32.mxu0 0.0
      %735 = vmatmul.mubr.f32.gmra.mrb[0].mxu0 %v668
      %v736 = vpop.f32.mrb[0].mxu0
      %v737 = vadd.f32 0.0, %v736
      %v738 = vpop.f32.mrb[0].mxu0
      %739 = vdwg.mxu0
      %v741 = vsel %vm230, %v591, 0
      %743 = vmatprep.subr.mxu0 0.0
      %744 = vmatpush1.msra.mxu0 %v228
      %745 = vmatprep.subr.mxu0 0.0
      %746 = vmatpush1.msra.mxu0 0.0
      %747 = vmatprep.subr.mxu0 0.0
      %748 = vmatpush1.msra.mxu0 0.0
      %749 = vmatprep.subr.mxu0 0.0
      %750 = vmatpush1.msra.mxu0 0.0
      %751 = vmatprep.subr.mxu0 0.0
      %752 = vmatpush1.msra.mxu0 0.0
      %753 = vmatprep.subr.mxu0 0.0
      %754 = vmatpush1.msra.mxu0 0.0
      %755 = vmatprep.subr.mxu0 0.0
      %756 = vmatpush1.msra.mxu0 0.0
      %757 = vmatprep.subr.mxu0 0.0
      %758 = vmatpush1.msra.mxu0 0.0
      %759 = vmatprep.subr.mxu0 0.0
      %760 = vmatpush1.msra.mxu0 0.0
      %761 = vmatprep.subr.mxu0 0.0
      %762 = vmatpush1.msra.mxu0 0.0
      %763 = vmatprep.subr.mxu0 0.0
      %764 = vmatpush1.msra.mxu0 0.0
      %765 = vmatprep.subr.mxu0 0.0
      %766 = vmatpush1.msra.mxu0 0.0
      %767 = vmatprep.subr.mxu0 0.0
      %768 = vmatpush1.msra.mxu0 0.0
      %769 = vmatprep.subr.mxu0 0.0
      %770 = vmatpush1.msra.mxu0 0.0
      %771 = vmatprep.subr.mxu0 0.0
      %772 = vmatpush1.msra.mxu0 0.0
      %773 = vmatprep.subr.mxu0 0.0
      %774 = vmatpush1.msra.mxu0 0.0
      %775 = vmatprep.subr.mxu0 0.0
      %776 = vmatpush1.msra.mxu0 0.0
      %777 = vmatprep.subr.mxu0 0.0
      %778 = vmatpush1.msra.mxu0 0.0
      %779 = vmatprep.subr.mxu0 0.0
      %780 = vmatpush1.msra.mxu0 0.0
      %781 = vmatprep.subr.mxu0 0.0
      %782 = vmatpush1.msra.mxu0 0.0
      %783 = vmatprep.subr.mxu0 0.0
      %784 = vmatpush1.msra.mxu0 0.0
      %785 = vmatprep.subr.mxu0 0.0
      %786 = vmatpush1.msra.mxu0 0.0
      %787 = vmatprep.subr.mxu0 0.0
      %788 = vmatpush1.msra.mxu0 0.0
      %789 = vmatprep.subr.mxu0 0.0
      %790 = vmatpush1.msra.mxu0 0.0
      %791 = vmatprep.subr.mxu0 0.0
      %792 = vmatpush1.msra.mxu0 0.0
      %793 = vmatprep.subr.mxu0 0.0
      %794 = vmatpush1.msra.mxu0 0.0
      %795 = vmatprep.subr.mxu0 0.0
      %796 = vmatpush1.msra.mxu0 0.0
      %797 = vmatprep.subr.mxu0 0.0
      %798 = vmatpush1.msra.mxu0 0.0
      %799 = vmatprep.subr.mxu0 0.0
      %800 = vmatpush1.msra.mxu0 0.0
      %801 = vmatprep.subr.mxu0 0.0
      %802 = vmatpush1.msra.mxu0 0.0
      %803 = vmatprep.subr.mxu0 0.0
      %804 = vmatpush1.msra.mxu0 0.0
      %805 = vmatprep.subr.mxu0 0.0
      %806 = vmatpush1.msra.mxu0 0.0
      %807 = vmatprep.mubr.f32.mxu0 0.0
      %808 = vmatmul.mubr.f32.gmra.mrb[0].mxu0 %v741
      %v809 = vpop.f32.mrb[0].mxu0
      %v810 = vadd.f32 0.0, %v809
      %v811 = vpop.f32.mrb[0].mxu0
      %812 = vdwg.mxu0
      %v814 = vsel %vm230, %v593, 0
      %816 = vmatprep.subr.mxu0 0.0
      %817 = vmatpush1.msra.mxu0 %v229
      %818 = vmatprep.subr.mxu0 0.0
      %819 = vmatpush1.msra.mxu0 0.0
      %820 = vmatprep.subr.mxu0 0.0
      %821 = vmatpush1.msra.mxu0 0.0
      %822 = vmatprep.subr.mxu0 0.0
      %823 = vmatpush1.msra.mxu0 0.0
      %824 = vmatprep.subr.mxu0 0.0
      %825 = vmatpush1.msra.mxu0 0.0
      %826 = vmatprep.subr.mxu0 0.0
      %827 = vmatpush1.msra.mxu0 0.0
      %828 = vmatprep.subr.mxu0 0.0
      %829 = vmatpush1.msra.mxu0 0.0
      %830 = vmatprep.subr.mxu0 0.0
      %831 = vmatpush1.msra.mxu0 0.0
      %832 = vmatprep.subr.mxu0 0.0
      %833 = vmatpush1.msra.mxu0 0.0
      %834 = vmatprep.subr.mxu0 0.0
      %835 = vmatpush1.msra.mxu0 0.0
      %836 = vmatprep.subr.mxu0 0.0
      %837 = vmatpush1.msra.mxu0 0.0
      %838 = vmatprep.subr.mxu0 0.0
      %839 = vmatpush1.msra.mxu0 0.0
      %840 = vmatprep.subr.mxu0 0.0
      %841 = vmatpush1.msra.mxu0 0.0
      %842 = vmatprep.subr.mxu0 0.0
      %843 = vmatpush1.msra.mxu0 0.0
      %844 = vmatprep.subr.mxu0 0.0
      %845 = vmatpush1.msra.mxu0 0.0
      %846 = vmatprep.subr.mxu0 0.0
      %847 = vmatpush1.msra.mxu0 0.0
      %848 = vmatprep.subr.mxu0 0.0
      %849 = vmatpush1.msra.mxu0 0.0
      %850 = vmatprep.subr.mxu0 0.0
      %851 = vmatpush1.msra.mxu0 0.0
      %852 = vmatprep.subr.mxu0 0.0
      %853 = vmatpush1.msra.mxu0 0.0
      %854 = vmatprep.subr.mxu0 0.0
      %855 = vmatpush1.msra.mxu0 0.0
      %856 = vmatprep.subr.mxu0 0.0
      %857 = vmatpush1.msra.mxu0 0.0
      %858 = vmatprep.subr.mxu0 0.0
      %859 = vmatpush1.msra.mxu0 0.0
      %860 = vmatprep.subr.mxu0 0.0
      %861 = vmatpush1.msra.mxu0 0.0
      %862 = vmatprep.subr.mxu0 0.0
      %863 = vmatpush1.msra.mxu0 0.0
      %864 = vmatprep.subr.mxu0 0.0
      %865 = vmatpush1.msra.mxu0 0.0
      %866 = vmatprep.subr.mxu0 0.0
      %867 = vmatpush1.msra.mxu0 0.0
      %868 = vmatprep.subr.mxu0 0.0
      %869 = vmatpush1.msra.mxu0 0.0
      %870 = vmatprep.subr.mxu0 0.0
      %871 = vmatpush1.msra.mxu0 0.0
      %872 = vmatprep.subr.mxu0 0.0
      %873 = vmatpush1.msra.mxu0 0.0
      %874 = vmatprep.subr.mxu0 0.0
      %875 = vmatpush1.msra.mxu0 0.0
      %876 = vmatprep.subr.mxu0 0.0
      %877 = vmatpush1.msra.mxu0 0.0
      %878 = vmatprep.subr.mxu0 0.0
      %879 = vmatpush1.msra.mxu0 0.0
      %880 = vmatprep.mubr.f32.mxu0 0.0
      %881 = vmatmul.mubr.f32.gmra.mrb[0].mxu0 %v814
      %v882 = vpop.f32.mrb[0].mxu0
      %v883 = vadd.f32 0.0, %v882
      %v884 = vpop.f32.mrb[0].mxu0
      %885 = vdwg.mxu0
      %886 = vst.msk [vmem:[%s216] sm:$0xff] %vm230, %v664
      %887 = vst.msk [vmem:[%s216 + $0x8] sm:$0xff] %vm230, %v737
      %888 = vst.msk [vmem:[%s216 + $0x10] sm:$0xff] %vm230, %v810
      %889 = vst.msk [vmem:[%s216 + $0x18] sm:$0xff] %vm230, %v883
      %s890 = smul.u32 4, %s14
      %p891 = scmp.lt.s32.totalorder %s890, 7
      %s892 = scalar_select %p891, %s890, 7
      %s893 = smul.addr %s892, 8
      %s894 = scalar_lea.vmem %s3, %s893
      // Predicated region
      $region33: #{gpt_forward.12} parent=31 // pred_check
        %p895 = pneg %p110
      $region34: #{gpt_forward.12} parent=31 // pred_check_branch
        %897 = sbr.rel (%p895) target = $region36
      $region35: #{gpt_forward.12} parent=31 // pred_region
        %s898 = smul.u32 4, %s14
      $region36: #{gpt_forward.12} parent=31 // pred_fallthru
        _
    $region32: #{gpt_forward.12} parent=5 // pred_fallthru
      _
    %p899 = scmp.le.s32.totalorder 2, %s9
    // Predicated region
    $region37: #{gpt_forward.12} parent=5 // pred_check
      %p900 = pneg %p899
    $region38: #{gpt_forward.12} parent=5 // pred_check_branch
      %902 = sbr.rel (%p900) target = $region40
    $region39: #{gpt_forward.12} parent=5 // pred_region
      %s903 = ssub.s32 %s9, 2
      // Predicated region
      $region41: #{gpt_forward.12} parent=39 // pred_check
        %p904 = pneg %p116
      $region42: #{gpt_forward.12} parent=39 // pred_check_branch
        %906 = sbr.rel (%p904) target = $region44
      $region43: #{gpt_forward.12} parent=39 // pred_region
        %s907 = smul.u32 4, %s15
        %p908 = scmp.lt.s32.totalorder %s907, 7
        %s909 = scalar_select %p908, %s907, 7
        %s910 = smul.addr %s909, 8
        %s911 = scalar_lea.vmem %s3, %s910
      $region44: #{gpt_forward.12} parent=39 // pred_fallthru
        _
    $region40: #{gpt_forward.12} parent=5 // pred_fallthru
      _
  $region6: #{gpt_forward.12} parent=0 // loop_footer
    %s13 = sadd.s32 1, %s9
  $region7: #{gpt_forward.12} parent=0 // loop_footer_branch
    %8 = sbr.rel target = $region3
  $region8: #{gpt_forward.12} parent=0 // loop_exit
    _

// kernel: gpt_forward.15
$region0: #{gpt_forward.15}
  #allocation0 [shape = 'u32[]', space=smem, size = 0x4, offset = 0x4, fixed_abs, tag = 'smem constant byte address 0x4 - core index']
  #allocation1 [shape = 'u32[144,128]{1,0:T(1,128)}', space=vmem, size = 0x12000, scoped, tag = 'internal scratch']
  #allocation2 [shape = 'f32[16,32]{1,0:T(8,128)}', space=vmem, size = 0x2000, scoped, tag = 'scratch operand']
  %s0 = inlined_call_operand.vmem [shape: f32[16,128], index: 0, kind: input, shape index: {}]
  %s1 = inlined_call_operand.vmem [shape: f32[128,32], index: 1, kind: input, shape index: {}]
  %s2 = inlined_call_operand.vmem [shape: f32[1,32], index: 2, kind: input, shape index: {}]
  %s3 = inlined_call_operand.vmem [shape: f32[16,32], index: 3, kind: input, shape index: {}]
  %s4 = inlined_call_operand.vmem [shape: f32[16,32], index: 4, kind: output, shape index: {}]
  %s5 = sld [smem:[#allocation0]]
  $region34: #{gpt_forward.15} parent=0
    _
  %s7 = ssub.s32 1, %s5
  %s8 = scalar_select 0, %s7, %s5
  // Predicated region
  $region2: #{gpt_forward.15} parent=0 // pred_check
    _
  $region3: #{gpt_forward.15} parent=0 // pred_check_branch
    %10 = sbr.rel (0) target = $region5
  $region4: #{gpt_forward.15} parent=0 // pred_region
    _
  $region5: #{gpt_forward.15} parent=0 // pred_fallthru
    _
  // Predicated region
  $region6: #{gpt_forward.15} parent=0 // pred_check
    _
  $region7: #{gpt_forward.15} parent=0 // pred_check_branch
    %12 = sbr.rel (0) target = $region9
  $region8: #{gpt_forward.15} parent=0 // pred_region
    _
  $region9: #{gpt_forward.15} parent=0 // pred_fallthru
    _
  // Predicated region
  $region10: #{gpt_forward.15} parent=0 // pred_check
    _
  $region11: #{gpt_forward.15} parent=0 // pred_check_branch
    %14 = sbr.rel (0) target = $region13
  $region12: #{gpt_forward.15} parent=0 // pred_region
    _
  $region13: #{gpt_forward.15} parent=0 // pred_fallthru
    _
  // Predicated region
  $region14: #{gpt_forward.15} parent=0 // pred_check
    _
  $region15: #{gpt_forward.15} parent=0 // pred_check_branch
    %16 = sbr.rel (0) target = $region17
  $region16: #{gpt_forward.15} parent=0 // pred_region
    _
  $region17: #{gpt_forward.15} parent=0 // pred_fallthru
    _
  %p17 = scmp.eq.s32.totalorder 0, 0
  // Predicated region
  $region18: #{gpt_forward.15} parent=0 // pred_check
    %p18 = pneg %p17
  $region19: #{gpt_forward.15} parent=0 // pred_check_branch
    %20 = sbr.rel (%p18) target = $region21
  $region20: #{gpt_forward.15} parent=0 // pred_region
    %vm21 = vcmask 261120
    %22 = vst.msk [vmem:[#allocation2] sm:$0xff] %vm21, 0.0
    %23 = vst.msk [vmem:[#allocation2 + $0x8] sm:$0xff] %vm21, 0.0
  $region21: #{gpt_forward.15} parent=0 // pred_fallthru
    _
  %v24 = vld [vmem:[#allocation2] sm:$0xff]
  %v25 = vld [vmem:[#allocation2 + $0x8] sm:$0xff]
  %v26 = vld [vmem:[%s0] sm:$0xff]
  %v27 = vld [vmem:[%s0 + $0x8] sm:$0xff]
  %v28 = vld [vmem:[%s1] sm:$0xff]
  %v29 = vld [vmem:[%s1 + $0x8] sm:$0xff]
  %v30 = vld [vmem:[%s1 + $0x10] sm:$0xff]
  %v31 = vld [vmem:[%s1 + $0x18] sm:$0xff]
  %v32 = vld [vmem:[%s1 + $0x20] sm:$0xff]
  %v33 = vld [vmem:[%s1 + $0x28] sm:$0xff]
  %v34 = vld [vmem:[%s1 + $0x30] sm:$0xff]
  %v35 = vld [vmem:[%s1 + $0x38] sm:$0xff]
  %v36 = vld [vmem:[%s1 + $0x40] sm:$0xff]
  %v37 = vld [vmem:[%s1 + $0x48] sm:$0xff]
  %v38 = vld [vmem:[%s1 + $0x50] sm:$0xff]
  %v39 = vld [vmem:[%s1 + $0x58] sm:$0xff]
  %v40 = vld [vmem:[%s1 + $0x60] sm:$0xff]
  %v41 = vld [vmem:[%s1 + $0x68] sm:$0xff]
  %v42 = vld [vmem:[%s1 + $0x70] sm:$0xff]
  %v43 = vld [vmem:[%s1 + $0x78] sm:$0xff]
  %44 = vmatprep.subr.mxu0 0.0
  %45 = vmatpush1.msra.mxu0 %v28
  %46 = vmatprep.subr.mxu0 0.0
  %47 = vmatpush1.msra.mxu0 %v29
  %48 = vmatprep.subr.mxu0 0.0
  %49 = vmatpush1.msra.mxu0 %v30
  %50 = vmatprep.subr.mxu0 0.0
  %51 = vmatpush1.msra.mxu0 %v31
  %52 = vmatprep.subr.mxu0 0.0
  %53 = vmatpush1.msra.mxu0 %v32
  %54 = vmatprep.subr.mxu0 0.0
  %55 = vmatpush1.msra.mxu0 %v33
  %56 = vmatprep.subr.mxu0 0.0
  %57 = vmatpush1.msra.mxu0 %v34
  %58 = vmatprep.subr.mxu0 0.0
  %59 = vmatpush1.msra.mxu0 %v35
  %60 = vmatprep.subr.mxu0 0.0
  %61 = vmatpush1.msra.mxu0 %v36
  %62 = vmatprep.subr.mxu0 0.0
  %63 = vmatpush1.msra.mxu0 %v37
  %64 = vmatprep.subr.mxu0 0.0
  %65 = vmatpush1.msra.mxu0 %v38
  %66 = vmatprep.subr.mxu0 0.0
  %67 = vmatpush1.msra.mxu0 %v39
  %68 = vmatprep.subr.mxu0 0.0
  %69 = vmatpush1.msra.mxu0 %v40
  %70 = vmatprep.subr.mxu0 0.0
  %71 = vmatpush1.msra.mxu0 %v41
  %72 = vmatprep.subr.mxu0 0.0
  %73 = vmatpush1.msra.mxu0 %v42
  %74 = vmatprep.subr.mxu0 0.0
  %75 = vmatpush1.msra.mxu0 %v43
  %76 = vmatprep.subr.mxu0 0.0
  %77 = vmatpush1.msra.mxu0 0.0
  %78 = vmatprep.subr.mxu0 0.0
  %79 = vmatpush1.msra.mxu0 0.0
  %80 = vmatprep.subr.mxu0 0.0
  %81 = vmatpush1.msra.mxu0 0.0
  %82 = vmatprep.subr.mxu0 0.0
  %83 = vmatpush1.msra.mxu0 0.0
  %84 = vmatprep.subr.mxu0 0.0
  %85 = vmatpush1.msra.mxu0 0.0
  %86 = vmatprep.subr.mxu0 0.0
  %87 = vmatpush1.msra.mxu0 0.0
  %88 = vmatprep.subr.mxu0 0.0
  %89 = vmatpush1.msra.mxu0 0.0
  %90 = vmatprep.subr.mxu0 0.0
  %91 = vmatpush1.msra.mxu0 0.0
  %92 = vmatprep.subr.mxu0 0.0
  %93 = vmatpush1.msra.mxu0 0.0
  %94 = vmatprep.subr.mxu0 0.0
  %95 = vmatpush1.msra.mxu0 0.0
  %96 = vmatprep.subr.mxu0 0.0
  %97 = vmatpush1.msra.mxu0 0.0
  %98 = vmatprep.subr.mxu0 0.0
  %99 = vmatpush1.msra.mxu0 0.0
  %100 = vmatprep.subr.mxu0 0.0
  %101 = vmatpush1.msra.mxu0 0.0
  %102 = vmatprep.subr.mxu0 0.0
  %103 = vmatpush1.msra.mxu0 0.0
  %104 = vmatprep.subr.mxu0 0.0
  %105 = vmatpush1.msra.mxu0 0.0
  %106 = vmatprep.subr.mxu0 0.0
  %107 = vmatpush1.msra.mxu0 0.0
  %108 = vmatprep.mubr.f32.mxu0 0.0
  %109 = vmatmul.mubr.f32.gmra.mrb[0].mxu0 %v26
  %v110 = vpop.f32.mrb[0].mxu0
  %v111 = vadd.f32 0.0, %v110
  %v112 = vpop.f32.mrb[0].mxu0
  %113 = vmatprep.mubr.f32.mxu0 0.0
  %114 = vmatmul.mubr.f32.gmra.mrb[0].mxu0 %v27
  %v115 = vpop.f32.mrb[0].mxu0
  %v116 = vadd.f32 0.0, %v115
  %v117 = vpop.f32.mrb[0].mxu0
  %118 = vdwg.mxu0
  %v119 = vadd.f32 %v24, %v111
  %v120 = vadd.f32 %v25, %v116
  %vm121 = vcmask 261120
  %122 = vst.msk [vmem:[#allocation2] sm:$0xff] %vm121, %v119
  %123 = vst.msk [vmem:[#allocation2 + $0x8] sm:$0xff] %vm121, %v120
  // Predicated region
  $region22: #{gpt_forward.15} parent=0 // pred_check
    %p124 = pneg %p17
  $region23: #{gpt_forward.15} parent=0 // pred_check_branch
    %126 = sbr.rel (%p124) target = $region25
  $region24: #{gpt_forward.15} parent=0 // pred_region
    %v127 = vld [vmem:[#allocation2] sm:$0xff]
    %v128 = vld [vmem:[#allocation2 + $0x8] sm:$0xff]
    %v129 = vld [vmem:[%s2] sm:$0x1]
    %v131 = vlaneseq
    %v132 = vshrl.u32 %v131, 7
    %v133 = vsub.s32 0, %v132
    %v134 = vrot.slane %v129, %v133
    %v136 = vadd.f32 %v127, %v134
    %v137 = vadd.f32 %v128, %v134
    %v138 = vld [vmem:[%s3] sm:$0xff]
    %v139 = vld [vmem:[%s3 + $0x8] sm:$0xff]
    %v140 = vadd.f32 %v136, %v138
    %v141 = vadd.f32 %v137, %v139
    %142 = vst.msk [vmem:[%s4] sm:$0xff] %vm121, %v140
    %143 = vst.msk [vmem:[%s4 + $0x8] sm:$0xff] %vm121, %v141
  $region25: #{gpt_forward.15} parent=0 // pred_fallthru
    _
  // Predicated region
  $region26: #{gpt_forward.15} parent=0 // pred_check
    _
  $region27: #{gpt_forward.15} parent=0 // pred_check_branch
    %145 = sbr.rel (0) target = $region29
  $region28: #{gpt_forward.15} parent=0 // pred_region
    _
  $region29: #{gpt_forward.15} parent=0 // pred_fallthru
    _
  // Predicated region
  $region30: #{gpt_forward.15} parent=0 // pred_check
    _
  $region31: #{gpt_forward.15} parent=0 // pred_check_branch
    %147 = sbr.rel (0) target = $region33
  $region32: #{gpt_forward.15} parent=0 // pred_region
    _
  $region33: #{gpt_forward.15} parent=0 // pred_fallthru
    _

// kernel: gpt_forward.21
$region0: #{gpt_forward.21}
  #allocation0 [shape = 'u32[]', space=smem, size = 0x4, offset = 0x4, fixed_abs, tag = 'smem constant byte address 0x4 - core index']
  #allocation1 [shape = 'u32[144,128]{1,0:T(1,128)}', space=vmem, size = 0x12000, scoped, tag = 'internal scratch']
  %s0 = inlined_call_operand.vmem [shape: f32[16,32], index: 0, kind: input, shape index: {}]
  %s1 = inlined_call_operand.vmem [shape: f32[1,32], index: 1, kind: input, shape index: {}]
  %s2 = inlined_call_operand.vmem [shape: f32[1,32], index: 2, kind: input, shape index: {}]
  %s3 = inlined_call_operand.vmem [shape: f32[32,64], index: 3, kind: input, shape index: {}]
  %s4 = inlined_call_operand.hbm [shape: f32[16,64], index: 4, kind: output, shape index: {}]
  %s5 = sld [smem:[#allocation0]]
  $region26: #{gpt_forward.21} parent=0
    _
  %s7 = ssub.s32 1, %s5
  %s8 = scalar_select 0, %s7, %s5
  $region1: #{gpt_forward.21} parent=0
    #allocation2 [shape = 'u8[8192]{0}', space=vmem, size = 0x2000, scoped, tag = 'output window, operand 0, single buffered']
    #allocation3 [shape = 's32[1]{0}', space=sflag, size = 0x4, scoped, tag = 'scoped memory for gpt_forward.21']
    %9 = vsyncpa [#allocation3], 0
    // Predicated region
    $region2: #{gpt_forward.21} parent=1 // pred_check
      _
    $region3: #{gpt_forward.21} parent=1 // pred_check_branch
      %11 = sbr.rel (0) target = $region5
    $region4: #{gpt_forward.21} parent=1 // pred_region
      _
    $region5: #{gpt_forward.21} parent=1 // pred_fallthru
      _
    // Predicated region
    $region6: #{gpt_forward.21} parent=1 // pred_check
      _
    $region7: #{gpt_forward.21} parent=1 // pred_check_branch
      %13 = sbr.rel (0) target = $region9
    $region8: #{gpt_forward.21} parent=1 // pred_region
      _
    $region9: #{gpt_forward.21} parent=1 // pred_fallthru
      _
    // Predicated region
    $region10: #{gpt_forward.21} parent=1 // pred_check
      _
    $region11: #{gpt_forward.21} parent=1 // pred_check_branch
      %15 = sbr.rel (0) target = $region13
    $region12: #{gpt_forward.21} parent=1 // pred_region
      _
    $region13: #{gpt_forward.21} parent=1 // pred_fallthru
      _
    // Predicated region
    $region14: #{gpt_forward.21} parent=1 // pred_check
      _
    $region15: #{gpt_forward.21} parent=1 // pred_check_branch
      %17 = sbr.rel (0) target = $region17
    $region16: #{gpt_forward.21} parent=1 // pred_region
      _
    $region17: #{gpt_forward.21} parent=1 // pred_fallthru
      _
    %v18 = vld [vmem:[%s0] sm:$0xff]
    %v19 = vld [vmem:[%s0 + $0x8] sm:$0xff]
    %vm20 = vcmask 261120
    %v21 = vsel %vm20, %v18, 0.0
    %22 = vadd.xlane.f32.xlu0 %v21
    %v23 = vpop.xlane.xlu0 %22
    %v24 = vsel %vm20, %v19, 0.0
    %25 = vadd.xlane.f32.xlu0 %v24
    %v26 = vpop.xlane.xlu0 %25
    %v27 = vrcp.pop 32.0
    %v28 = vmul.f32 %v23, %v27
    %v29 = vmul.f32 %v26, %v27
    %v30 = vsub.f32 %v18, %v28
    %v31 = vsub.f32 %v19, %v29
    %v32 = vmul.f32 %v30, %v30
    %v33 = vmul.f32 %v31, %v31
    %v34 = vsel %vm20, %v32, 0.0
    %35 = vadd.xlane.f32.xlu0 %v34
    %v36 = vpop.xlane.xlu0 %35
    %v37 = vsel %vm20, %v33, 0.0
    %38 = vadd.xlane.f32.xlu0 %v37
    %v39 = vpop.xlane.xlu0 %38
    %v40 = vmul.f32 %v36, %v27
    %v41 = vmul.f32 %v39, %v27
    %v42 = vadd.f32 %v40, 1e-05
    %v43 = vadd.f32 %v41, 1e-05
    %v44 = vrsqrt.pop %v42
    %v45 = vrsqrt.pop %v43
    %v46 = vmul.f32 %v30, %v44
    %v47 = vmul.f32 %v31, %v45
    %v48 = vld [vmem:[%s1] sm:$0x1]
    %v50 = vlaneseq
    %v51 = vshrl.u32 %v50, 7
    %v52 = vsub.s32 0, %v51
    %v53 = vrot.slane %v48, %v52
    %v55 = vmul.f32 %v46, %v53
    %v56 = vmul.f32 %v47, %v53
    %v57 = vld [vmem:[%s2] sm:$0x1]
    %v59 = vlaneseq
    %v60 = vshrl.u32 %v59, 7
    %v61 = vsub.s32 0, %v60
    %v62 = vrot.slane %v57, %v61
    %v64 = vadd.f32 %v55, %v62
    %v65 = vadd.f32 %v56, %v62
    %v66 = vld [vmem:[%s3] sm:$0xff]
    %v67 = vld [vmem:[%s3 + $0x8] sm:$0xff]
    %v68 = vld [vmem:[%s3 + $0x10] sm:$0xff]
    %v69 = vld [vmem:[%s3 + $0x18] sm:$0xff]
    %v71 = vsel %vm20, %v64, 0
    %v74 = vsel %vm20, %v65, 0
    %76 = vmatprep.subr.mxu0 0.0
    %77 = vmatpush1.msra.mxu0 %v66
    %78 = vmatprep.subr.mxu0 0.0
    %79 = vmatpush1.msra.mxu0 %v67
    %80 = vmatprep.subr.mxu0 0.0
    %81 = vmatpush1.msra.mxu0 %v68
    %82 = vmatprep.subr.mxu0 0.0
    %83 = vmatpush1.msra.mxu0 %v69
    %84 = vmatprep.subr.mxu0 0.0
    %85 = vmatpush1.msra.mxu0 0.0
    %86 = vmatprep.subr.mxu0 0.0
    %87 = vmatpush1.msra.mxu0 0.0
    %88 = vmatprep.subr.mxu0 0.0
    %89 = vmatpush1.msra.mxu0 0.0
    %90 = vmatprep.subr.mxu0 0.0
    %91 = vmatpush1.msra.mxu0 0.0
    %92 = vmatprep.subr.mxu0 0.0
    %93 = vmatpush1.msra.mxu0 0.0
    %94 = vmatprep.subr.mxu0 0.0
    %95 = vmatpush1.msra.mxu0 0.0
    %96 = vmatprep.subr.mxu0 0.0
    %97 = vmatpush1.msra.mxu0 0.0
    %98 = vmatprep.subr.mxu0 0.0
    %99 = vmatpush1.msra.mxu0 0.0
    %100 = vmatprep.subr.mxu0 0.0
    %101 = vmatpush1.msra.mxu0 0.0
    %102 = vmatprep.subr.mxu0 0.0
    %103 = vmatpush1.msra.mxu0 0.0
    %104 = vmatprep.subr.mxu0 0.0
    %105 = vmatpush1.msra.mxu0 0.0
    %106 = vmatprep.subr.mxu0 0.0
    %107 = vmatpush1.msra.mxu0 0.0
    %108 = vmatprep.subr.mxu0 0.0
    %109 = vmatpush1.msra.mxu0 0.0
    %110 = vmatprep.subr.mxu0 0.0
    %111 = vmatpush1.msra.mxu0 0.0
    %112 = vmatprep.subr.mxu0 0.0
    %113 = vmatpush1.msra.mxu0 0.0
    %114 = vmatprep.subr.mxu0 0.0
    %115 = vmatpush1.msra.mxu0 0.0
    %116 = vmatprep.subr.mxu0 0.0
    %117 = vmatpush1.msra.mxu0 0.0
    %118 = vmatprep.subr.mxu0 0.0
    %119 = vmatpush1.msra.mxu0 0.0
    %120 = vmatprep.subr.mxu0 0.0
    %121 = vmatpush1.msra.mxu0 0.0
    %122 = vmatprep.subr.mxu0 0.0
    %123 = vmatpush1.msra.mxu0 0.0
    %124 = vmatprep.subr.mxu0 0.0
    %125 = vmatpush1.msra.mxu0 0.0
    %126 = vmatprep.subr.mxu0 0.0
    %127 = vmatpush1.msra.mxu0 0.0
    %128 = vmatprep.subr.mxu0 0.0
    %129 = vmatpush1.msra.mxu0 0.0
    %130 = vmatprep.subr.mxu0 0.0
    %131 = vmatpush1.msra.mxu0 0.0
    %132 = vmatprep.subr.mxu0 0.0
    %133 = vmatpush1.msra.mxu0 0.0
    %134 = vmatprep.subr.mxu0 0.0
    %135 = vmatpush1.msra.mxu0 0.0
    %136 = vmatprep.subr.mxu0 0.0
    %137 = vmatpush1.msra.mxu0 0.0
    %138 = vmatprep.subr.mxu0 0.0
    %139 = vmatpush1.msra.mxu0 0.0
    %140 = vmatprep.mubr.f32.mxu0 0.0
    %141 = vmatmul.mubr.f32.gmra.mrb[0].mxu0 %v71
    %v142 = vpop.f32.mrb[0].mxu0
    %v143 = vadd.f32 0.0, %v142
    %v144 = vpop.f32.mrb[0].mxu0
    %145 = vmatprep.mubr.f32.mxu0 0.0
    %146 = vmatmul.mubr.f32.gmra.mrb[0].mxu0 %v74
    %v147 = vpop.f32.mrb[0].mxu0
    %v148 = vadd.f32 0.0, %v147
    %v149 = vpop.f32.mrb[0].mxu0
    %150 = vdwg.mxu0
    %vm151 = vcmask 523264
    %152 = vst.msk [vmem:[#allocation2] sm:$0xff] %vm151, %v143
    %153 = vst.msk [vmem:[#allocation2 + $0x8] sm:$0xff] %vm151, %v148
    // Predicated region
    $region18: #{gpt_forward.21} parent=1 // pred_check
      _
    $region19: #{gpt_forward.21} parent=1 // pred_check_branch
      %155 = sbr.rel (0) target = $region21
    $region20: #{gpt_forward.21} parent=1 // pred_region
      %s157 = ssub.s32 256, 256
      %158 = vsyncadd [#allocation3], %s157
      %s159 = sshll.u32 [#allocation2], 4
      %s160 = int_to_ptr.vmem [resolvable:$true] %s159
      %165 = dma.vmem_to_hbm [thread:$0]  %s160, 256, %s4, [#allocation3], 128, 128, 8
    $region21: #{gpt_forward.21} parent=1 // pred_fallthru
      _
    // Predicated region
    $region22: #{gpt_forward.21} parent=1 // pred_check
      _
    $region23: #{gpt_forward.21} parent=1 // pred_check_branch
      %167 = sbr.rel (0) target = $region25
    $region24: #{gpt_forward.21} parent=1 // pred_region
      %168 = dma.done [#allocation3], 256
    $region25: #{gpt_forward.21} parent=1 // pred_fallthru
      _
    %169 = vsyncpa [#allocation3], 1

</llo_original>
